<compile_context>
chip_gen: v5e
topology: v5e:2x2
jax: 0.10.0
libtpu: 0.0.40
codegen_flags: <defaults>
</compile_context>

<pallas_src>
import functools

import jax
import jax.numpy as jnp
from jax.experimental import pallas as pl
from jax.experimental.pallas import tpu as pltpu

NEG_SLOPE = 0.2
BN_EPS = 1e-3
KH = KW = 5
STRIDE = 2
LANE = 128


def _round_up(x, m):
    return (x + m - 1) // m * m


def _vmem_limit_bytes(default=64 * 1024 * 1024):
    # v5e/v6e: 128 MiB physical -> 64 MiB; v7x: 64 MiB physical -> 48 MiB.
    try:
        cap = int(pltpu.get_tpu_info().vmem_capacity_bytes)
        return int(min(default, cap * 3 // 4))
    except Exception:  # conservative fallback if the query is unavailable
        return 32 * 1024 * 1024


def _pick_row_tile(hout, wsp, c4, wout, cout, cpad, budget, row_tile_max):
    """Largest TH (multiple of 4) whose pass-1 working set fits the VMEM budget."""
    best = 4
    th = 4
    th_cap = max(4, min(_round_up(hout, 4), _round_up(row_tile_max, 4)))
    while th <= th_cap:
        m = th * wsp
        need = (2 * m * c4 * 2              # body input blocks (x2 buffers, bf16)
                + 2 * 4 * wsp * c4 * 2      # halo input blocks
                + 2 * 9 * c4 * cpad * 2     # weights
                + 2 * cpad * 4              # bias
                + 2 * th * wout * cout * 4  # cropped `down` output blocks
                + 4 * cpad * 4 * 2          # stats output blocks
                + (th + 4) * wsp * c4 * 2   # xbuf (bf16 staging)
                + (th + 4) * wsp * c4 * 4   # xodd (f32 shadow for odd taps)
                + m * 9 * c4 * 2)           # wide-K slab (bf16)
        if need <= budget:
            best = th
        th += 4
    return best


def _conv_stats_kernel(xb_ref, xh_ref, w_ref, b_ref,
                       down_ref, ssum_ref, ssq_ref,
                       xbuf, xodd, slab,
                       *, th, wsp, wout, hout, cout, cpad, c4):
    """Conv (one wide-K MXU matmul) + bias + cropped down + masked partial BN stats."""
    m_tile = th * wsp

    # Stage contiguous s2d rows (tile body + 4*wsp halo) in bf16 (aligned copies
    # only).  A small f32 shadow serves the odd-row-offset taps so we never slice
    # packed bf16 at odd sublane offsets.
    body = xb_ref[0]
    halo = xh_ref[0]
    xbuf[0:m_tile, :] = body
    xbuf[m_tile:m_tile + 4 * wsp, :] = halo
    xodd[0:m_tile, :] = body.astype(jnp.float32)
    xodd[m_tile:m_tile + 4 * wsp, :] = halo.astype(jnp.float32)

    # Wide-K slab: the 9 shifted row-windows side by side along K, so the whole
    # 5x5 / stride-2 conv becomes ONE matmul with K = 9 * 4 * Cin.
    for qh in range(3):
        for qw in range(3):
            q = qh * 3 + qw
            off = qh * wsp + qw
            if qw == 1:  # odd row offset -> read f32 shadow (cheap sublane shift)
                tap = xodd[off:off + m_tile, :].astype(jnp.bfloat16)
            else:        # even offsets are sublane-aligned for packed bf16
                tap = xbuf[off:off + m_tile, :]
            slab[:, q * c4:(q + 1) * c4] = tap

    acc = jnp.dot(slab[...], w_ref[...], preferred_element_type=jnp.float32)
    d3 = (acc + b_ref[...]).reshape(th, wsp, cpad)

    # Cropped NHWC `down` tile: the (Wsp, Cpad) padding never reaches HBM.
    down_ref[0] = d3[:, :wout, :cout]

    # Masked partial BN statistics.  Junk columns are cropped away, rows past
    # Hout are masked via iota + program_id, junk channels are exactly zero.
    row0 = pl.program_id(1) * th
    rows = jax.lax.broadcasted_iota(jnp.int32, (th, 1, 1), 0) + row0
    valid = (rows < hout).astype(jnp.float32)
    dc = d3[:, :wout, :]
    dm = dc * valid
    ssum_ref[0, 0] = jnp.sum(jnp.sum(dm, axis=0), axis=0, keepdims=True)
    ssq_ref[0, 0] = jnp.sum(jnp.sum(dm * dc, axis=0), axis=0, keepdims=True)


def _bn_act_kernel(down_ref, scale_ref, shift_ref, act_ref):
    """y = down * scale + shift (folded BN), then LeakyReLU(0.2), cropped layout."""
    y = down_ref[0] * scale_ref[0] + shift_ref[0]
    act_ref[0] = jnp.where(y >= 0.0, y, NEG_SLOPE * y)


@functools.partial(jax.jit, static_argnames=("row_tile",))
def encoder_block(x_nchw, conv_w, conv_b, bn_gamma, bn_beta, *, row_tile=64):
    """x_nchw: (N, Cin, H, W) f32.  Returns (down, act), both (N, Cout, Hout, Wout)."""
    N, Cin, H, W = x_nchw.shape
    Cout = conv_w.shape[0]

    Hout = (H + 3 - KH) // STRIDE + 1
    Wout = (W + 3 - KW) // STRIDE + 1
    Wsp = _round_up(Wout + 2, 8)          # s2d cols: +2 shift cols, 8-aligned
    C4 = 4 * Cin                          # 2x2 phases x Cin
    Cpad = _round_up(Cout, LANE)          # lane-dense channels inside the kernel

    vlimit = _vmem_limit_bytes()
    TH = _pick_row_tile(Hout, Wsp, C4, Wout, Cout, Cpad, int(vlimit * 0.7), row_tile)
    nh = pl.cdiv(Hout, TH)
    Hs = nh * TH + 4                      # s2d rows incl. 4-row halo for last tile
    M_TILE = TH * Wsp
    Hpad2 = nh * TH

    # ---- glue: asymmetric pad (top/left=1, bottom/right>=2) + 2x2 space-to-depth ----
    xp = jnp.pad(x_nchw, ((0, 0), (0, 0),
                          (1, 2 * Hs - H - 1), (1, 2 * Wsp - W - 1)))
    xs = xp.reshape(N, Cin, Hs, 2, Wsp, 2)
    xs = jnp.transpose(xs, (0, 2, 4, 3, 5, 1)).reshape(N, Hs * Wsp, C4)
    xs = xs.astype(jnp.bfloat16)          # halves input DMA; f32 accumulation in MXU

    # ---- weights: (Cout, Cin, 5, 5) -> one (9*4*Cin, Cpad) wide-K bf16 matrix ----
    w_pad = jnp.pad(conv_w, ((0, Cpad - Cout), (0, 0), (0, 1), (0, 1)))  # 6x6 kernel
    w6 = w_pad.reshape(Cpad, Cin, 3, 2, 3, 2)          # (Cpad, Cin, qh, ph, qw, pw)
    w_flat = jnp.transpose(w6, (2, 4, 3, 5, 1, 0)).reshape(9 * C4, Cpad)
    w_flat = w_flat.astype(jnp.bfloat16)
    b_pad = jnp.pad(conv_b.reshape(1, Cout), ((0, 0), (0, Cpad - Cout)))

    # ---- pass 1: conv (wide-K matmul) + bias + cropped down + partial BN stats ----
    conv_kernel = functools.partial(
        _conv_stats_kernel, th=TH, wsp=Wsp, wout=Wout, hout=Hout,
        cout=Cout, cpad=Cpad, c4=C4)
    down_nhwc, ssum, ssq = pl.pallas_call(
        conv_kernel,
        out_shape=(
            jax.ShapeDtypeStruct((N, Hpad2, Wout, Cout), jnp.float32),
            jax.ShapeDtypeStruct((N, nh, 1, Cpad), jnp.float32),
            jax.ShapeDtypeStruct((N, nh, 1, Cpad), jnp.float32)),
        grid=(N, nh),
        in_specs=[
            pl.BlockSpec((1, M_TILE, C4), lambda n, i: (n, i, 0)),              # body
            pl.BlockSpec((1, 4 * Wsp, C4),
                         lambda n, i: (n, (i + 1) * (TH // 4), 0)),             # halo
            pl.BlockSpec((9 * C4, Cpad), lambda n, i: (0, 0)),                  # weights
            pl.BlockSpec((1, Cpad), lambda n, i: (0, 0)),                       # bias
        ],
        out_specs=(
            pl.BlockSpec((1, TH, Wout, Cout), lambda n, i: (n, i, 0, 0)),       # down
            pl.BlockSpec((1, 1, 1, Cpad), lambda n, i: (n, i, 0, 0)),           # sum
            pl.BlockSpec((1, 1, 1, Cpad), lambda n, i: (n, i, 0, 0)),           # sum sq
        ),
        scratch_shapes=[
            pltpu.VMEM(((TH + 4) * Wsp, C4), jnp.bfloat16),                     # xbuf
            pltpu.VMEM(((TH + 4) * Wsp, C4), jnp.float32),                      # xodd
            pltpu.VMEM((M_TILE, 9 * C4), jnp.bfloat16),                         # slab
        ],
        compiler_params=pltpu.CompilerParams(
            dimension_semantics=("parallel", "parallel"),
            vmem_limit_bytes=vlimit),
    )(xs, xs, w_flat, b_pad)

    # ---- fold BN (training-mode batch stats) into per-channel scale/shift ----
    cnt = jnp.float32(N * Hout * Wout)
    s1 = jnp.sum(ssum, axis=(0, 1, 2))[:Cout]
    s2 = jnp.sum(ssq, axis=(0, 1, 2))[:Cout]
    mean = s1 / cnt
    # NOTE: E[x^2]-E[x]^2 in f32; fine at these sizes, use a shifted/two-pass sum
    # if deployed with very large N*Hout*Wout or large |mean|/std ratios.
    var = jnp.maximum(s2 / cnt - mean * mean, 0.0)       # biased var (BN training)
    inv = jax.lax.rsqrt(var + BN_EPS)
    scale = (bn_gamma * inv).reshape(1, Cout).astype(jnp.float32)
    shift = (bn_beta - mean * bn_gamma * inv).reshape(1, Cout).astype(jnp.float32)

    # ---- pass 2: normalize + LeakyReLU directly on the cropped NHWC layout ----
    act_nhwc = pl.pallas_call(
        _bn_act_kernel,
        out_shape=jax.ShapeDtypeStruct((N, Hpad2, Wout, Cout), jnp.float32),
        grid=(N, nh),
        in_specs=[
            pl.BlockSpec((1, TH, Wout, Cout), lambda n, i: (n, i, 0, 0)),
            pl.BlockSpec((1, Cout), lambda n, i: (0, 0)),
            pl.BlockSpec((1, Cout), lambda n, i: (0, 0)),
        ],
        out_specs=pl.BlockSpec((1, TH, Wout, Cout), lambda n, i: (n, i, 0, 0)),
        compiler_params=pltpu.CompilerParams(
            dimension_semantics=("parallel", "parallel"),
            vmem_limit_bytes=vlimit),
    )(down_nhwc, scale, shift)

    def to_nchw(t):
        return jnp.transpose(t[:, :Hout], (0, 3, 1, 2))

    # TODO(synk): running_mean/running_var momentum update is a module side effect
    # (not part of the returned tensors) and is not reproduced here.
    return to_nchw(down_nhwc), to_nchw(act_nhwc)


def _reference(x_nchw, conv_w, conv_b, bn_gamma, bn_beta):
    """Pure-JAX reference mirroring the PyTorch forward (training-mode BN)."""
    xp = jnp.pad(x_nchw, ((0, 0), (0, 0), (1, 2), (1, 2)))
    down = jax.lax.conv_general_dilated(
        xp, conv_w, window_strides=(STRIDE, STRIDE), padding="VALID",
        dimension_numbers=("NCHW", "OIHW", "NCHW"),
        precision=jax.lax.Precision.HIGHEST)
    down = down + conv_b[None, :, None, None]
    mean = jnp.mean(down, axis=(0, 2, 3), keepdims=True)
    var = jnp.mean((down - mean) ** 2, axis=(0, 2, 3), keepdims=True)
    y = (down - mean) * jax.lax.rsqrt(var + BN_EPS)
    y = y * bn_gamma[None, :, None, None] + bn_beta[None, :, None, None]
    act = jnp.where(y >= 0, y, NEG_SLOPE * y)
    return down, act


if __name__ == "__main__":
    N, Cin, H, W = 2, 4, 16, 16
    Cout = 8

    key = jax.random.PRNGKey(0)
    k_x, k_w, k_b = jax.random.split(key, 3)

    x = jax.random.normal(k_x, (N, Cin, H, W), dtype=jnp.float32)
    fan_in = Cin * KH * KW
    bound = 1.0 / (fan_in ** 0.5)
    conv_w = jax.random.uniform(k_w, (Cout, Cin, KH, KW), jnp.float32, -bound, bound)
    conv_b = jax.random.uniform(k_b, (Cout,), jnp.float32, -bound, bound)
    bn_gamma = jnp.ones((Cout,), jnp.float32)   # PyTorch BatchNorm2d default affine
    bn_beta = jnp.zeros((Cout,), jnp.float32)

    down, act = encoder_block(x, conv_w, conv_b, bn_gamma, bn_beta)
    jax.block_until_ready((down, act))

    ref_down, ref_act = _reference(x, conv_w, conv_b, bn_gamma, bn_beta)
    Hout = (H + 3 - KH) // STRIDE + 1
    Wout = (W + 3 - KW) // STRIDE + 1
    assert down.shape == ref_down.shape == (N, Cout, Hout, Wout)
    assert act.shape == ref_act.shape
    # bf16 matmul operands (f32 accumulation) -> looser tolerance than f32-HIGHEST.
    assert jnp.allclose(down, ref_down, atol=3e-2, rtol=3e-2), \
        float(jnp.max(jnp.abs(down - ref_down)))
    assert jnp.allclose(act, ref_act, atol=3e-2, rtol=3e-2), \
        float(jnp.max(jnp.abs(act - ref_act)))

    print("KERNEL_OK")
</pallas_src>

<mosaic_0001>
module attributes {stable_mosaic.version = 11 : i64} {
  func.func @_conv_stats_kernel(%arg0: i32, %arg1: i32, %arg2: memref<1x128x16xbf16, #tpu.memory_space<vmem>>, %arg3: memref<1x64x16xbf16, #tpu.memory_space<vmem>>, %arg4: memref<144x128xbf16, #tpu.memory_space<vmem>>, %arg5: memref<1x128xf32, #tpu.memory_space<vmem>>, %arg6: memref<1x8x8x8xf32, #tpu.memory_space<vmem>>, %arg7: memref<1x1x1x128xf32, #tpu.memory_space<vmem>>, %arg8: memref<1x1x1x128xf32, #tpu.memory_space<vmem>>, %arg9: memref<192x16xbf16, #tpu.memory_space<vmem>>, %arg10: memref<192x16xf32, #tpu.memory_space<vmem>>, %arg11: memref<128x144xbf16, #tpu.memory_space<vmem>>) attributes {dimension_semantics = [#tpu.dimension_semantics<parallel>, #tpu.dimension_semantics<parallel>], iteration_bounds = array<i64: 2, 1>, scalar_prefetch = 0 : i64, scratch_operands = 3 : i64, tpu.core_type = #tpu.core_type<tc>, window_params = [{transform_indices = @transform_0, window_bounds = array<i64: 1, 128, 16>}, {transform_indices = @transform_1, window_bounds = array<i64: 1, 64, 16>}, {pipeline_mode = #tpu.pipeline_mode<synchronous>, transform_indices = @transform_2, window_bounds = array<i64: 144, 128>}, {pipeline_mode = #tpu.pipeline_mode<synchronous>, transform_indices = @transform_3, window_bounds = array<i64: 1, 128>}, {transform_indices = @transform_4, window_bounds = array<i64: 1, 8, 8, 8>}, {transform_indices = @transform_5, window_bounds = array<i64: 1, 1, 1, 128>}, {transform_indices = @transform_6, window_bounds = array<i64: 1, 1, 1, 128>}]} {
    %c0 = arith.constant 0 : index
    %c0_0 = arith.constant 0 : index
    %c0_1 = arith.constant 0 : index
    %0 = vector.load %arg2[%c0, %c0_0, %c0_1] : memref<1x128x16xbf16, #tpu.memory_space<vmem>>, vector<1x128x16xbf16>
    %1 = vector.shape_cast %0 : vector<1x128x16xbf16> to vector<128x16xbf16>
    %c0_2 = arith.constant 0 : index
    %c0_3 = arith.constant 0 : index
    %c0_4 = arith.constant 0 : index
    %2 = vector.load %arg3[%c0_2, %c0_3, %c0_4] : memref<1x64x16xbf16, #tpu.memory_space<vmem>>, vector<1x64x16xbf16>
    %3 = vector.shape_cast %2 : vector<1x64x16xbf16> to vector<64x16xbf16>
    %c0_5 = arith.constant 0 : index
    %c0_6 = arith.constant 0 : index
    %4 = vector.load %arg9[%c0_5, %c0_6] : memref<192x16xbf16, #tpu.memory_space<vmem>>, vector<128x16xbf16>
    tpu.vector_store %arg9[%c0_5, %c0_6], %1 {strides = array<i32>} : memref<192x16xbf16, #tpu.memory_space<vmem>>, vector<128x16xbf16>,
    %c128 = arith.constant 128 : index
    %c0_7 = arith.constant 0 : index
    %5 = vector.load %arg9[%c128, %c0_7] : memref<192x16xbf16, #tpu.memory_space<vmem>>, vector<64x16xbf16>
    tpu.vector_store %arg9[%c128, %c0_7], %3 {strides = array<i32>} : memref<192x16xbf16, #tpu.memory_space<vmem>>, vector<64x16xbf16>,
    %6 = arith.extf %1 : vector<128x16xbf16> to vector<128x16xf32>
    %c0_8 = arith.constant 0 : index
    %c0_9 = arith.constant 0 : index
    %7 = vector.load %arg10[%c0_8, %c0_9] : memref<192x16xf32, #tpu.memory_space<vmem>>, vector<128x16xf32>
    tpu.vector_store %arg10[%c0_8, %c0_9], %6 {strides = array<i32>} : memref<192x16xf32, #tpu.memory_space<vmem>>, vector<128x16xf32>,
    %8 = arith.extf %3 : vector<64x16xbf16> to vector<64x16xf32>
    %c128_10 = arith.constant 128 : index
    %c0_11 = arith.constant 0 : index
    %9 = vector.load %arg10[%c128_10, %c0_11] : memref<192x16xf32, #tpu.memory_space<vmem>>, vector<64x16xf32>
    tpu.vector_store %arg10[%c128_10, %c0_11], %8 {strides = array<i32>} : memref<192x16xf32, #tpu.memory_space<vmem>>, vector<64x16xf32>,
    %c0_12 = arith.constant 0 : index
    %c0_13 = arith.constant 0 : index
    %10 = vector.load %arg9[%c0_12, %c0_13] : memref<192x16xbf16, #tpu.memory_space<vmem>>, vector<128x16xbf16>
    %c0_14 = arith.constant 0 : index
    %c0_15 = arith.constant 0 : index
    %11 = vector.load %arg11[%c0_14, %c0_15] : memref<128x144xbf16, #tpu.memory_space<vmem>>, vector<128x16xbf16>
    tpu.vector_store %arg11[%c0_14, %c0_15], %10 {strides = array<i32>} : memref<128x144xbf16, #tpu.memory_space<vmem>>, vector<128x16xbf16>,
    %c1 = arith.constant 1 : index
    %c0_16 = arith.constant 0 : index
    %12 = vector.load %arg10[%c1, %c0_16] : memref<192x16xf32, #tpu.memory_space<vmem>>, vector<128x16xf32>
    %13 = arith.truncf %12 : vector<128x16xf32> to vector<128x16xbf16>
    %c0_17 = arith.constant 0 : index
    %c16 = arith.constant 16 : index
    %14 = vector.load %arg11[%c0_17, %c16] : memref<128x144xbf16, #tpu.memory_space<vmem>>, vector<128x16xbf16>
    tpu.vector_store %arg11[%c0_17, %c16], %13 {strides = array<i32>} : memref<128x144xbf16, #tpu.memory_space<vmem>>, vector<128x16xbf16>,
    %c2 = arith.constant 2 : index
    %c0_18 = arith.constant 0 : index
    %15 = vector.load %arg9[%c2, %c0_18] : memref<192x16xbf16, #tpu.memory_space<vmem>>, vector<128x16xbf16>
    %c0_19 = arith.constant 0 : index
    %c32 = arith.constant 32 : index
    %16 = vector.load %arg11[%c0_19, %c32] : memref<128x144xbf16, #tpu.memory_space<vmem>>, vector<128x16xbf16>
    tpu.vector_store %arg11[%c0_19, %c32], %15 {strides = array<i32>} : memref<128x144xbf16, #tpu.memory_space<vmem>>, vector<128x16xbf16>,
    %c16_20 = arith.constant 16 : index
    %c0_21 = arith.constant 0 : index
    %17 = vector.load %arg9[%c16_20, %c0_21] : memref<192x16xbf16, #tpu.memory_space<vmem>>, vector<128x16xbf16>
    %c0_22 = arith.constant 0 : index
    %c48 = arith.constant 48 : index
    %18 = vector.load %arg11[%c0_22, %c48] : memref<128x144xbf16, #tpu.memory_space<vmem>>, vector<128x16xbf16>
    tpu.vector_store %arg11[%c0_22, %c48], %17 {strides = array<i32>} : memref<128x144xbf16, #tpu.memory_space<vmem>>, vector<128x16xbf16>,
    %c17 = arith.constant 17 : index
    %c0_23 = arith.constant 0 : index
    %19 = vector.load %arg10[%c17, %c0_23] : memref<192x16xf32, #tpu.memory_space<vmem>>, vector<128x16xf32>
    %20 = arith.truncf %19 : vector<128x16xf32> to vector<128x16xbf16>
    %c0_24 = arith.constant 0 : index
    %c64 = arith.constant 64 : index
    %21 = vector.load %arg11[%c0_24, %c64] : memref<128x144xbf16, #tpu.memory_space<vmem>>, vector<128x16xbf16>
    tpu.vector_store %arg11[%c0_24, %c64], %20 {strides = array<i32>} : memref<128x144xbf16, #tpu.memory_space<vmem>>, vector<128x16xbf16>,
    %c18 = arith.constant 18 : index
    %c0_25 = arith.constant 0 : index
    %22 = vector.load %arg9[%c18, %c0_25] : memref<192x16xbf16, #tpu.memory_space<vmem>>, vector<128x16xbf16>
    %c0_26 = arith.constant 0 : index
    %c80 = arith.constant 80 : index
    %23 = vector.load %arg11[%c0_26, %c80] : memref<128x144xbf16, #tpu.memory_space<vmem>>, vector<128x16xbf16>
    tpu.vector_store %arg11[%c0_26, %c80], %22 {strides = array<i32>} : memref<128x144xbf16, #tpu.memory_space<vmem>>, vector<128x16xbf16>,
    %c32_27 = arith.constant 32 : index
    %c0_28 = arith.constant 0 : index
    %24 = vector.load %arg9[%c32_27, %c0_28] : memref<192x16xbf16, #tpu.memory_space<vmem>>, vector<128x16xbf16>
    %c0_29 = arith.constant 0 : index
    %c96 = arith.constant 96 : index
    %25 = vector.load %arg11[%c0_29, %c96] : memref<128x144xbf16, #tpu.memory_space<vmem>>, vector<128x16xbf16>
    tpu.vector_store %arg11[%c0_29, %c96], %24 {strides = array<i32>} : memref<128x144xbf16, #tpu.memory_space<vmem>>, vector<128x16xbf16>,
    %c33 = arith.constant 33 : index
    %c0_30 = arith.constant 0 : index
    %26 = vector.load %arg10[%c33, %c0_30] : memref<192x16xf32, #tpu.memory_space<vmem>>, vector<128x16xf32>
    %27 = arith.truncf %26 : vector<128x16xf32> to vector<128x16xbf16>
    %c0_31 = arith.constant 0 : index
    %c112 = arith.constant 112 : index
    %28 = vector.load %arg11[%c0_31, %c112] : memref<128x144xbf16, #tpu.memory_space<vmem>>, vector<128x16xbf16>
    tpu.vector_store %arg11[%c0_31, %c112], %27 {strides = array<i32>} : memref<128x144xbf16, #tpu.memory_space<vmem>>, vector<128x16xbf16>,
    %c34 = arith.constant 34 : index
    %c0_32 = arith.constant 0 : index
    %29 = vector.load %arg9[%c34, %c0_32] : memref<192x16xbf16, #tpu.memory_space<vmem>>, vector<128x16xbf16>
    %c0_33 = arith.constant 0 : index
    %c128_34 = arith.constant 128 : index
    %30 = vector.load %arg11[%c0_33, %c128_34] : memref<128x144xbf16, #tpu.memory_space<vmem>>, vector<128x16xbf16>
    tpu.vector_store %arg11[%c0_33, %c128_34], %29 {strides = array<i32>} : memref<128x144xbf16, #tpu.memory_space<vmem>>, vector<128x16xbf16>,
    %c0_35 = arith.constant 0 : index
    %c0_36 = arith.constant 0 : index
    %31 = vector.load %arg11[%c0_35, %c0_36] : memref<128x144xbf16, #tpu.memory_space<vmem>>, vector<128x144xbf16>
    %c0_37 = arith.constant 0 : index
    %c0_38 = arith.constant 0 : index
    %32 = vector.load %arg4[%c0_37, %c0_38] : memref<144x128xbf16, #tpu.memory_space<vmem>>, vector<144x128xbf16>
    %cst = arith.constant dense<0.000000e+00> : vector<128x128xf32>
    %33 = tpu.matmul %31, %32, %cst {dimension_numbers = #tpu.dot_dimension_numbers<[1], [0], [0], [1], [0, 0, 1, 1], [], []>} : vector<128x144xbf16>, vector<144x128xbf16>, vector<128x128xf32> -> vector<128x128xf32>
    %c0_39 = arith.constant 0 : index
    %c0_40 = arith.constant 0 : index
    %34 = vector.load %arg5[%c0_39, %c0_40] : memref<1x128xf32, #tpu.memory_space<vmem>>, vector<1x128xf32>
    %35 = vector.broadcast %34 : vector<1x128xf32> to vector<128x128xf32>
    %36 = arith.addf %33, %35 : vector<128x128xf32>
    %37 = vector.shape_cast %36 : vector<128x128xf32> to vector<8x16x128xf32>
    %38 = vector.extract_strided_slice %37 {offsets = [0, 0, 0], sizes = [8, 8, 8], strides = [1, 1, 1]} : vector<8x16x128xf32> to vector<8x8x8xf32>
    %c0_41 = arith.constant 0 : index
    %c0_42 = arith.constant 0 : index
    %c0_43 = arith.constant 0 : index
    %c0_44 = arith.constant 0 : index
    %39 = vector.load %arg6[%c0_41, %c0_42, %c0_43, %c0_44] : memref<1x8x8x8xf32, #tpu.memory_space<vmem>>, vector<1x8x8x8xf32>
    %40 = vector.shape_cast %39 : vector<1x8x8x8xf32> to vector<8x8x8xf32>
    %41 = vector.shape_cast %38 : vector<8x8x8xf32> to vector<1x8x8x8xf32>
    tpu.vector_store %arg6[%c0_41, %c0_42, %c0_43, %c0_44], %41 {strides = array<i32>} : memref<1x8x8x8xf32, #tpu.memory_space<vmem>>, vector<1x8x8x8xf32>,
    %c8_i32 = arith.constant 8 : i32
    %42 = arith.muli %arg1, %c8_i32 : i32
    %43 = tpu.iota {dimensions = array<i32: 0>} : vector<8x1x1xi32>
    %44 = vector.broadcast %42 : i32 to vector<8x1x1xi32>
    %45 = arith.addi %43, %44 : vector<8x1x1xi32>
    %c8_i32_45 = arith.constant 8 : i32
    %46 = vector.broadcast %c8_i32_45 : i32 to vector<8x1x1xi32>
    %47 = arith.cmpi slt, %45, %46 : vector<8x1x1xi32>
    %48 = arith.extui %47 : vector<8x1x1xi1> to vector<8x1x1xi32>
    %49 = arith.sitofp %48 : vector<8x1x1xi32> to vector<8x1x1xf32>
    %50 = vector.extract_strided_slice %37 {offsets = [0, 0, 0], sizes = [8, 8, 128], strides = [1, 1, 1]} : vector<8x16x128xf32> to vector<8x8x128xf32>
    %51 = vector.broadcast %49 : vector<8x1x1xf32> to vector<8x8x128xf32>
    %52 = arith.mulf %50, %51 : vector<8x8x128xf32>
    %cst_46 = arith.constant dense<0.000000e+00> : vector<8x128xf32>
    %53 = vector.multi_reduction <add>, %52, %cst_46 [0] : vector<8x8x128xf32> to vector<8x128xf32>
    %cst_47 = arith.constant dense<0.000000e+00> : vector<128xf32>
    %54 = vector.multi_reduction <add>, %53, %cst_47 [0] : vector<8x128xf32> to vector<128xf32>
    %55 = vector.shape_cast %54 : vector<128xf32> to vector<1x128xf32>
    %c0_48 = arith.constant 0 : index
    %c0_49 = arith.constant 0 : index
    %c0_50 = arith.constant 0 : index
    %c0_51 = arith.constant 0 : index
    %56 = vector.load %arg7[%c0_48, %c0_49, %c0_50, %c0_51] : memref<1x1x1x128xf32, #tpu.memory_space<vmem>>, vector<1x1x1x128xf32>
    %57 = vector.shape_cast %56 : vector<1x1x1x128xf32> to vector<1x128xf32>
    %58 = vector.shape_cast %55 : vector<1x128xf32> to vector<1x1x1x128xf32>
    tpu.vector_store %arg7[%c0_48, %c0_49, %c0_50, %c0_51], %58 {strides = array<i32>} : memref<1x1x1x128xf32, #tpu.memory_space<vmem>>, vector<1x1x1x128xf32>,
    %59 = arith.mulf %52, %50 : vector<8x8x128xf32>
    %cst_52 = arith.constant dense<0.000000e+00> : vector<8x128xf32>
    %60 = vector.multi_reduction <add>, %59, %cst_52 [0] : vector<8x8x128xf32> to vector<8x128xf32>
    %cst_53 = arith.constant dense<0.000000e+00> : vector<128xf32>
    %61 = vector.multi_reduction <add>, %60, %cst_53 [0] : vector<8x128xf32> to vector<128xf32>
    %62 = vector.shape_cast %61 : vector<128xf32> to vector<1x128xf32>
    %c0_54 = arith.constant 0 : index
    %c0_55 = arith.constant 0 : index
    %c0_56 = arith.constant 0 : index
    %c0_57 = arith.constant 0 : index
    %63 = vector.load %arg8[%c0_54, %c0_55, %c0_56, %c0_57] : memref<1x1x1x128xf32, #tpu.memory_space<vmem>>, vector<1x1x1x128xf32>
    %64 = vector.shape_cast %63 : vector<1x1x1x128xf32> to vector<1x128xf32>
    %65 = vector.shape_cast %62 : vector<1x128xf32> to vector<1x1x1x128xf32>
    tpu.vector_store %arg8[%c0_54, %c0_55, %c0_56, %c0_57], %65 {strides = array<i32>} : memref<1x1x1x128xf32, #tpu.memory_space<vmem>>, vector<1x1x1x128xf32>,
    return
  }
  func.func @transform_0(%arg0: i32, %arg1: i32) -> (i32, i32, i32) {
    %c0_i32 = arith.constant 0 : i32
    %c0_i32_0 = arith.constant 0 : i32
    return %arg0, %arg1, %c0_i32 : i32, i32, i32
  }
  func.func @transform_1(%arg0: i32, %arg1: i32) -> (i32, i32, i32) {
    %c1_i32 = arith.constant 1 : i32
    %0 = arith.addi %arg1, %c1_i32 : i32
    %c2_i32 = arith.constant 2 : i32
    %1 = arith.muli %0, %c2_i32 : i32
    %c0_i32 = arith.constant 0 : i32
    %c0_i32_0 = arith.constant 0 : i32
    return %arg0, %1, %c0_i32 : i32, i32, i32
  }
  func.func @transform_2(%arg0: i32, %arg1: i32) -> (i32, i32) {
    %c0_i32 = arith.constant 0 : i32
    %c0_i32_0 = arith.constant 0 : i32
    %c0_i32_1 = arith.constant 0 : i32
    return %c0_i32, %c0_i32_0 : i32, i32
  }
  func.func @transform_3(%arg0: i32, %arg1: i32) -> (i32, i32) {
    %c0_i32 = arith.constant 0 : i32
    %c0_i32_0 = arith.constant 0 : i32
    %c0_i32_1 = arith.constant 0 : i32
    return %c0_i32, %c0_i32_0 : i32, i32
  }
  func.func @transform_4(%arg0: i32, %arg1: i32) -> (i32, i32, i32, i32) {
    %c0_i32 = arith.constant 0 : i32
    %c0_i32_0 = arith.constant 0 : i32
    %c0_i32_1 = arith.constant 0 : i32
    return %arg0, %arg1, %c0_i32, %c0_i32_0 : i32, i32, i32, i32
  }
  func.func @transform_5(%arg0: i32, %arg1: i32) -> (i32, i32, i32, i32) {
    %c0_i32 = arith.constant 0 : i32
    %c0_i32_0 = arith.constant 0 : i32
    %c0_i32_1 = arith.constant 0 : i32
    return %arg0, %arg1, %c0_i32, %c0_i32_0 : i32, i32, i32, i32
  }
  func.func @transform_6(%arg0: i32, %arg1: i32) -> (i32, i32, i32, i32) {
    %c0_i32 = arith.constant 0 : i32
    %c0_i32_0 = arith.constant 0 : i32
    %c0_i32_1 = arith.constant 0 : i32
    return %arg0, %arg1, %c0_i32, %c0_i32_0 : i32, i32, i32, i32
  }
}

module attributes {stable_mosaic.version = 11 : i64} {
  func.func @_bn_act_kernel(%arg0: i32, %arg1: i32, %arg2: memref<1x8x8x8xf32, #tpu.memory_space<vmem>>, %arg3: memref<1x8xf32, #tpu.memory_space<vmem>>, %arg4: memref<1x8xf32, #tpu.memory_space<vmem>>, %arg5: memref<1x8x8x8xf32, #tpu.memory_space<vmem>>) attributes {dimension_semantics = [#tpu.dimension_semantics<parallel>, #tpu.dimension_semantics<parallel>], iteration_bounds = array<i64: 2, 1>, scalar_prefetch = 0 : i64, scratch_operands = 0 : i64, tpu.core_type = #tpu.core_type<tc>, window_params = [{transform_indices = @transform_0, window_bounds = array<i64: 1, 8, 8, 8>}, {pipeline_mode = #tpu.pipeline_mode<synchronous>, transform_indices = @transform_1, window_bounds = array<i64: 1, 8>}, {pipeline_mode = #tpu.pipeline_mode<synchronous>, transform_indices = @transform_2, window_bounds = array<i64: 1, 8>}, {transform_indices = @transform_3, window_bounds = array<i64: 1, 8, 8, 8>}]} {
    %c0 = arith.constant 0 : index
    %c0_0 = arith.constant 0 : index
    %c0_1 = arith.constant 0 : index
    %c0_2 = arith.constant 0 : index
    %0 = vector.load %arg2[%c0, %c0_0, %c0_1, %c0_2] : memref<1x8x8x8xf32, #tpu.memory_space<vmem>>, vector<1x8x8x8xf32>
    %1 = vector.shape_cast %0 : vector<1x8x8x8xf32> to vector<8x8x8xf32>
    %c0_3 = arith.constant 0 : index
    %c0_4 = arith.constant 0 : index
    %2 = vector.load %arg3[%c0_3, %c0_4] : memref<1x8xf32, #tpu.memory_space<vmem>>, vector<1x8xf32>
    %3 = vector.shape_cast %2 : vector<1x8xf32> to vector<8xf32>
    %4 = vector.shape_cast %3 : vector<8xf32> to vector<1x1x8xf32>
    %5 = vector.broadcast %4 : vector<1x1x8xf32> to vector<8x8x8xf32>
    %6 = arith.mulf %1, %5 : vector<8x8x8xf32>
    %c0_5 = arith.constant 0 : index
    %c0_6 = arith.constant 0 : index
    %7 = vector.load %arg4[%c0_5, %c0_6] : memref<1x8xf32, #tpu.memory_space<vmem>>, vector<1x8xf32>
    %8 = vector.shape_cast %7 : vector<1x8xf32> to vector<8xf32>
    %9 = vector.shape_cast %8 : vector<8xf32> to vector<1x1x8xf32>
    %10 = vector.broadcast %9 : vector<1x1x8xf32> to vector<8x8x8xf32>
    %11 = arith.addf %6, %10 : vector<8x8x8xf32>
    %cst = arith.constant 0.000000e+00 : f32
    %12 = vector.broadcast %cst : f32 to vector<8x8x8xf32>
    %13 = arith.cmpf oge, %11, %12 : vector<8x8x8xf32>
    %cst_7 = arith.constant 2.000000e-01 : f32
    %14 = vector.broadcast %cst_7 : f32 to vector<8x8x8xf32>
    %15 = arith.mulf %14, %11 : vector<8x8x8xf32>
    %16 = arith.select %13, %11, %15 : vector<8x8x8xi1>, vector<8x8x8xf32>
    %c0_8 = arith.constant 0 : index
    %c0_9 = arith.constant 0 : index
    %c0_10 = arith.constant 0 : index
    %c0_11 = arith.constant 0 : index
    %17 = vector.load %arg5[%c0_8, %c0_9, %c0_10, %c0_11] : memref<1x8x8x8xf32, #tpu.memory_space<vmem>>, vector<1x8x8x8xf32>
    %18 = vector.shape_cast %17 : vector<1x8x8x8xf32> to vector<8x8x8xf32>
    %19 = vector.shape_cast %16 : vector<8x8x8xf32> to vector<1x8x8x8xf32>
    tpu.vector_store %arg5[%c0_8, %c0_9, %c0_10, %c0_11], %19 {strides = array<i32>} : memref<1x8x8x8xf32, #tpu.memory_space<vmem>>, vector<1x8x8x8xf32>,
    return
  }
  func.func @transform_0(%arg0: i32, %arg1: i32) -> (i32, i32, i32, i32) {
    %c0_i32 = arith.constant 0 : i32
    %c0_i32_0 = arith.constant 0 : i32
    %c0_i32_1 = arith.constant 0 : i32
    return %arg0, %arg1, %c0_i32, %c0_i32_0 : i32, i32, i32, i32
  }
  func.func @transform_1(%arg0: i32, %arg1: i32) -> (i32, i32) {
    %c0_i32 = arith.constant 0 : i32
    %c0_i32_0 = arith.constant 0 : i32
    %c0_i32_1 = arith.constant 0 : i32
    return %c0_i32, %c0_i32_0 : i32, i32
  }
  func.func @transform_2(%arg0: i32, %arg1: i32) -> (i32, i32) {
    %c0_i32 = arith.constant 0 : i32
    %c0_i32_0 = arith.constant 0 : i32
    %c0_i32_1 = arith.constant 0 : i32
    return %c0_i32, %c0_i32_0 : i32, i32
  }
  func.func @transform_3(%arg0: i32, %arg1: i32) -> (i32, i32, i32, i32) {
    %c0_i32 = arith.constant 0 : i32
    %c0_i32_0 = arith.constant 0 : i32
    %c0_i32_1 = arith.constant 0 : i32
    return %arg0, %arg1, %c0_i32, %c0_i32_0 : i32, i32, i32, i32
  }
}

</mosaic_0001>

<llo_original>
// kernel: encoder_block.3
$region0: #{encoder_block.3}
  #allocation0 [shape = 'u32[]', space=smem, size = 0x4, offset = 0x4, fixed_abs, tag = 'smem constant byte address 0x4 - core index']
  #allocation1 [shape = 'u32[72,128]{1,0:T(1,128)}', space=vmem, size = 0x9000, scoped, tag = 'internal scratch']
  %s0 = inlined_call_operand.vmem [shape: f32[2,8,8,8], index: 0, kind: input, shape index: {}]
  %s1 = inlined_call_operand.vmem [shape: f32[1,8], index: 1, kind: input, shape index: {}]
  %s2 = inlined_call_operand.vmem [shape: f32[1,8], index: 2, kind: input, shape index: {}]
  %s3 = inlined_call_operand.vmem [shape: f32[2,8,8,8], index: 3, kind: output, shape index: {}]
  %s4 = sld [smem:[#allocation0]]
  $region45: #{encoder_block.3} parent=0
    _
  %s6 = ssub.s32 1, %s4
  %s7 = scalar_select 0, %s6, %s4
  loop: start=0, step=1, limit=4
  $region2: #{encoder_block.3} parent=0 // loop_pre_header
    _
  $region3: #{encoder_block.3} parent=0 // loop_header
    %s9 = sphi 0, %s13
    %p10 = scmp.ge.s32.totalorder %s9, 4
    %s16 = sphi 0, %s28
    %s17 = sphi 0, %s24
    %s18 = sphi 0, %s16
    %s19 = sphi 0, %s17
    %s20 = sphi 0, %s18
    %s21 = sphi 0, %s19
    %s33 = sphi 0, %s35
    %s36 = sphi 0, %s33
    %s37 = sphi 0, %s36
    %s53 = sphi 0, %s37
    %s57 = sphi 0, %s57
    %s59 = sphi 0, %s57
    %s60 = sphi 0, %s59
    %s74 = sphi 0, %s60
    %s78 = sphi 0, %s78
    %s80 = sphi 0, %s78
    %s81 = sphi 0, %s80
    %s95 = sphi 0, %s81
    %s103 = sphi 0, %s105
    %s106 = sphi 0, %s103
    %s107 = sphi 0, %s106
    %s123 = sphi 0, %s107
  $region4: #{encoder_block.3} parent=0 // loop_header_branch
    %12 = sbr.rel (%p10) target = $region8
  $region5: #{encoder_block.3} parent=0 // loop_body
    %s14 = ssub.s32 %s9, 1
    %s15 = ssub.s32 %s9, 2
    %s22 = sadd.s32 1, %s17
    %p23 = scmp.ge.s32.totalorder %s22, 1
    %s24 = scalar_select %p23, 0, %s22
    %s25 = sadd.s32 1, %s16
    %s26 = scalar_select %p23, %s25, %s16
    %p27 = scmp.ge.s32.totalorder %s26, 2
    %s28 = scalar_select %p27, 0, %s26
    %s29 = ssub.s32 %s16, %s28
    %s30 = ssub.s32 %s17, %s24
    %s31 = sor.u32 %s29, %s30
    %p32 = scmp.eq.s32.totalorder %s31, 0
    %s34 = sadd.s32 %s33, 1
    %s35 = scalar_select %p32, %s33, %s34
    %p38 = pneg %p32
    %p39 = scmp.eq.s32.totalorder %s9, 1
    %p40 = por %p38, %p39
    %p41 = scmp.ne.s32.totalorder %s33, %s36
    %p42 = scmp.eq.s32.totalorder %s9, 0
    %p43 = por %p41, %p42
    %p44 = scmp.ne.s32.totalorder %s33, %s36
    %p45 = scmp.eq.s32.totalorder %s14, 1
    %p46 = por %p44, %p45
    %p47 = scmp.ne.s32.totalorder %s36, %s37
    %p48 = scmp.eq.s32.totalorder %s14, 0
    %p49 = por %p47, %p48
    %p50 = scmp.ne.s32.totalorder %s36, %s37
    %p51 = scmp.eq.s32.totalorder %s15, 1
    %p52 = por %p50, %p51
    %p54 = scmp.ne.s32.totalorder %s37, %s53
    %p55 = scmp.eq.s32.totalorder %s15, 0
    %p56 = por %p54, %p55
    %s58 = sadd.s32 %s57, 1
    %p61 = scmp.eq.s32.totalorder %s9, 1
    %p62 = scmp.ne.s32.totalorder %s57, %s59
    %p63 = scmp.eq.s32.totalorder %s9, 0
    %p64 = por %p62, %p63
    %p65 = scmp.ne.s32.totalorder %s57, %s59
    %p66 = scmp.eq.s32.totalorder %s14, 1
    %p67 = por %p65, %p66
    %p68 = scmp.ne.s32.totalorder %s59, %s60
    %p69 = scmp.eq.s32.totalorder %s14, 0
    %p70 = por %p68, %p69
    %p71 = scmp.ne.s32.totalorder %s59, %s60
    %p72 = scmp.eq.s32.totalorder %s15, 1
    %p73 = por %p71, %p72
    %p75 = scmp.ne.s32.totalorder %s60, %s74
    %p76 = scmp.eq.s32.totalorder %s15, 0
    %p77 = por %p75, %p76
    %s79 = sadd.s32 %s78, 1
    %p82 = scmp.eq.s32.totalorder %s9, 1
    %p83 = scmp.ne.s32.totalorder %s78, %s80
    %p84 = scmp.eq.s32.totalorder %s9, 0
    %p85 = por %p83, %p84
    %p86 = scmp.ne.s32.totalorder %s78, %s80
    %p87 = scmp.eq.s32.totalorder %s14, 1
    %p88 = por %p86, %p87
    %p89 = scmp.ne.s32.totalorder %s80, %s81
    %p90 = scmp.eq.s32.totalorder %s14, 0
    %p91 = por %p89, %p90
    %p92 = scmp.ne.s32.totalorder %s80, %s81
    %p93 = scmp.eq.s32.totalorder %s15, 1
    %p94 = por %p92, %p93
    %p96 = scmp.ne.s32.totalorder %s81, %s95
    %p97 = scmp.eq.s32.totalorder %s15, 0
    %p98 = por %p96, %p97
    %s99 = ssub.s32 %s16, %s28
    %s100 = ssub.s32 %s17, %s24
    %s101 = sor.u32 %s99, %s100
    %p102 = scmp.eq.s32.totalorder %s101, 0
    %s104 = sadd.s32 %s103, 1
    %s105 = scalar_select %p102, %s103, %s104
    %p108 = pneg %p102
    %p109 = scmp.eq.s32.totalorder %s9, 1
    %p110 = por %p108, %p109
    %p111 = scmp.ne.s32.totalorder %s103, %s106
    %p112 = scmp.eq.s32.totalorder %s9, 0
    %p113 = por %p111, %p112
    %p114 = scmp.ne.s32.totalorder %s103, %s106
    %p115 = scmp.eq.s32.totalorder %s14, 1
    %p116 = por %p114, %p115
    %p117 = scmp.ne.s32.totalorder %s106, %s107
    %p118 = scmp.eq.s32.totalorder %s14, 0
    %p119 = por %p117, %p118
    %p120 = scmp.ne.s32.totalorder %s106, %s107
    %p121 = scmp.eq.s32.totalorder %s15, 1
    %p122 = por %p120, %p121
    %p124 = scmp.ne.s32.totalorder %s107, %s123
    %p125 = scmp.eq.s32.totalorder %s15, 0
    %p126 = por %p124, %p125
    %p127 = scmp.le.s32.totalorder 1, %s9
    %p128 = scmp.lt.s32.totalorder %s9, 3
    %p129 = pnand %p127, %p128
    %p130 = pneg %p129
    // Predicated region
    $region9: #{encoder_block.3} parent=5 // pred_check
      _
    $region10: #{encoder_block.3} parent=5 // pred_check_branch
      %132 = sbr.rel (%p129) target = $region12
    $region11: #{encoder_block.3} parent=5 // pred_region
      %s133 = ssub.s32 %s9, 1
      // Predicated region
      $region13: #{encoder_block.3} parent=11 // pred_check
        %p134 = pneg %p70
      $region14: #{encoder_block.3} parent=11 // pred_check_branch
        %136 = sbr.rel (%p134) target = $region16
      $region15: #{encoder_block.3} parent=11 // pred_region
        _
      $region16: #{encoder_block.3} parent=11 // pred_fallthru
        _
      // Predicated region
      $region17: #{encoder_block.3} parent=11 // pred_check
        %p137 = pneg %p91
      $region18: #{encoder_block.3} parent=11 // pred_check_branch
        %139 = sbr.rel (%p137) target = $region20
      $region19: #{encoder_block.3} parent=11 // pred_region
        _
      $region20: #{encoder_block.3} parent=11 // pred_fallthru
        _
    $region12: #{encoder_block.3} parent=5 // pred_fallthru
      _
    %p140 = scmp.lt.s32.totalorder %s9, 2
    // Predicated region
    $region21: #{encoder_block.3} parent=5 // pred_check
      %p141 = pneg %p140
    $region22: #{encoder_block.3} parent=5 // pred_check_branch
      %143 = sbr.rel (%p141) target = $region24
    $region23: #{encoder_block.3} parent=5 // pred_region
      // Predicated region
      $region25: #{encoder_block.3} parent=23 // pred_check
        %p144 = pneg %p43
      $region26: #{encoder_block.3} parent=23 // pred_check_branch
        %146 = sbr.rel (%p144) target = $region28
      $region27: #{encoder_block.3} parent=23 // pred_region
        %s147 = smul.u32 8, %s17
        %p148 = scmp.lt.s32.totalorder %s16, 1
        %s149 = scalar_select %p148, %s16, 1
        %p150 = scmp.lt.s32.totalorder %s147, 7
        %s151 = scalar_select %p150, %s147, 7
        %s152 = smul.addr %s149, 8
        %s153 = sadd.s32 %s151, %s152
        %s154 = smul.addr %s153, 8
        %s155 = scalar_lea.vmem %s0, %s154
        %s156 = smul.u32 8, %s17
      $region28: #{encoder_block.3} parent=23 // pred_fallthru
        _
    $region24: #{encoder_block.3} parent=5 // pred_fallthru
      _
    %p157 = scmp.le.s32.totalorder 1, %s9
    %p158 = scmp.lt.s32.totalorder %s9, 3
    %p159 = pnand %p157, %p158
    %p160 = pneg %p159
    // Predicated region
    $region29: #{encoder_block.3} parent=5 // pred_check
      _
    $region30: #{encoder_block.3} parent=5 // pred_check_branch
      %162 = sbr.rel (%p159) target = $region32
    $region31: #{encoder_block.3} parent=5 // pred_region
      %s163 = ssub.s32 %s9, 1
      %s164 = smul.u32 8, %s19
      %p165 = scmp.lt.s32.totalorder %s18, 1
      %s166 = scalar_select %p165, %s18, 1
      %p167 = scmp.lt.s32.totalorder %s164, 7
      %s168 = scalar_select %p167, %s164, 7
      %s169 = smul.addr %s166, 8
      %s170 = sadd.s32 %s168, %s169
      %s171 = smul.addr %s170, 8
      %s172 = scalar_lea.vmem %s0, %s171
      %p173 = pneg %p49
      %p174 = pneg %p46
      %p175 = pneg %p70
      %p176 = pneg %p67
      %p177 = pneg %p91
      %p178 = pneg %p88
      %p179 = pneg %p119
      %p180 = pneg %p116
      %s181 = smul.u32 8, %s19
      %p182 = scmp.lt.s32.totalorder %s18, 1
      %s183 = scalar_select %p182, %s18, 1
      %p184 = scmp.lt.s32.totalorder %s181, 7
      %s185 = scalar_select %p184, %s181, 7
      %s186 = smul.addr %s183, 8
      %s187 = sadd.s32 %s185, %s186
      %s188 = smul.addr %s187, 8
      %s189 = scalar_lea.vmem %s3, %s188
      %s190 = smul.u32 8, %s19
      %p191 = scmp.lt.s32.totalorder %s18, 1
      %s192 = scalar_select %p191, %s18, 1
      %p193 = scmp.lt.s32.totalorder %s190, 7
      %s194 = scalar_select %p193, %s190, 7
      %s195 = smul.addr %s192, 8
      %s196 = sadd.s32 %s194, %s195
      %s197 = smul.addr %s196, 8
      %s198 = scalar_lea.vmem %s0, %s197
      %s199 = smul.u32 8, %s19
      %s200 = smul.u32 8, %s19
      %p201 = scmp.lt.s32.totalorder %s18, 1
      %s202 = scalar_select %p201, %s18, 1
      %p203 = scmp.lt.s32.totalorder %s200, 7
      %s204 = scalar_select %p203, %s200, 7
      %s205 = smul.addr %s202, 8
      %s206 = sadd.s32 %s204, %s205
      %s207 = smul.addr %s206, 8
      %s208 = scalar_lea.vmem %s3, %s207
      %s209 = smul.u32 8, %s19
      %v210 = vld [vmem:[%s198] sm:$0xff]
      %v211 = vld [vmem:[%s198 + $0x8] sm:$0xff]
      %v212 = vld [vmem:[%s198 + $0x10] sm:$0xff]
      %v213 = vld [vmem:[%s198 + $0x18] sm:$0xff]
      %v214 = vld [vmem:[%s198 + $0x20] sm:$0xff]
      %v215 = vld [vmem:[%s198 + $0x28] sm:$0xff]
      %v216 = vld [vmem:[%s198 + $0x30] sm:$0xff]
      %v217 = vld [vmem:[%s198 + $0x38] sm:$0xff]
      %v218 = vld [vmem:[%s1] sm:$0x1]
      %v220 = vperm.slane %v218, 0
      %v222 = vmul.f32 %v210, %v220
      %v223 = vmul.f32 %v211, %v220
      %v224 = vmul.f32 %v212, %v220
      %v225 = vmul.f32 %v213, %v220
      %v226 = vmul.f32 %v214, %v220
      %v227 = vmul.f32 %v215, %v220
      %v228 = vmul.f32 %v216, %v220
      %v229 = vmul.f32 %v217, %v220
      %v230 = vld [vmem:[%s2] sm:$0x1]
      %v232 = vperm.slane %v230, 0
      %v234 = vadd.f32 %v222, %v232
      %v235 = vadd.f32 %v223, %v232
      %v236 = vadd.f32 %v224, %v232
      %v237 = vadd.f32 %v225, %v232
      %v238 = vadd.f32 %v226, %v232
      %v239 = vadd.f32 %v227, %v232
      %v240 = vadd.f32 %v228, %v232
      %v241 = vadd.f32 %v229, %v232
      %vm242 = vcmp.ge.f32.partialorder %v234, 0.0
      %vm243 = vcmp.ge.f32.partialorder %v235, 0.0
      %vm244 = vcmp.ge.f32.partialorder %v236, 0.0
      %vm245 = vcmp.ge.f32.partialorder %v237, 0.0
      %vm246 = vcmp.ge.f32.partialorder %v238, 0.0
      %vm247 = vcmp.ge.f32.partialorder %v239, 0.0
      %vm248 = vcmp.ge.f32.partialorder %v240, 0.0
      %vm249 = vcmp.ge.f32.partialorder %v241, 0.0
      %v250 = vmul.f32 %v234, 0.2
      %v251 = vmul.f32 %v235, 0.2
      %v252 = vmul.f32 %v236, 0.2
      %v253 = vmul.f32 %v237, 0.2
      %v254 = vmul.f32 %v238, 0.2
      %v255 = vmul.f32 %v239, 0.2
      %v256 = vmul.f32 %v240, 0.2
      %v257 = vmul.f32 %v241, 0.2
      %v258 = vsel %vm242, %v234, %v250
      %v259 = vsel %vm243, %v235, %v251
      %v260 = vsel %vm244, %v236, %v252
      %v261 = vsel %vm245, %v237, %v253
      %v262 = vsel %vm246, %v238, %v254
      %v263 = vsel %vm247, %v239, %v255
      %v264 = vsel %vm248, %v240, %v256
      %v265 = vsel %vm249, %v241, %v257
      %vm266 = vcmask 64512
      %267 = vst.msk [vmem:[%s208] sm:$0xff] %vm266, %v258
      %268 = vst.msk [vmem:[%s208 + $0x8] sm:$0xff] %vm266, %v259
      %269 = vst.msk [vmem:[%s208 + $0x10] sm:$0xff] %vm266, %v260
      %270 = vst.msk [vmem:[%s208 + $0x18] sm:$0xff] %vm266, %v261
      %271 = vst.msk [vmem:[%s208 + $0x20] sm:$0xff] %vm266, %v262
      %272 = vst.msk [vmem:[%s208 + $0x28] sm:$0xff] %vm266, %v263
      %273 = vst.msk [vmem:[%s208 + $0x30] sm:$0xff] %vm266, %v264
      %274 = vst.msk [vmem:[%s208 + $0x38] sm:$0xff] %vm266, %v265
      %s275 = smul.u32 8, %s19
      %p276 = scmp.lt.s32.totalorder %s18, 1
      %s277 = scalar_select %p276, %s18, 1
      %p278 = scmp.lt.s32.totalorder %s275, 7
      %s279 = scalar_select %p278, %s275, 7
      %s280 = smul.addr %s277, 8
      %s281 = sadd.s32 %s279, %s280
      %s282 = smul.addr %s281, 8
      %s283 = scalar_lea.vmem %s3, %s282
      // Predicated region
      $region33: #{encoder_block.3} parent=31 // pred_check
        %p284 = pneg %p116
      $region34: #{encoder_block.3} parent=31 // pred_check_branch
        %286 = sbr.rel (%p284) target = $region36
      $region35: #{encoder_block.3} parent=31 // pred_region
        %s287 = smul.u32 8, %s19
      $region36: #{encoder_block.3} parent=31 // pred_fallthru
        _
    $region32: #{encoder_block.3} parent=5 // pred_fallthru
      _
    %p288 = scmp.le.s32.totalorder 2, %s9
    // Predicated region
    $region37: #{encoder_block.3} parent=5 // pred_check
      %p289 = pneg %p288
    $region38: #{encoder_block.3} parent=5 // pred_check_branch
      %291 = sbr.rel (%p289) target = $region40
    $region39: #{encoder_block.3} parent=5 // pred_region
      %s292 = ssub.s32 %s9, 2
      // Predicated region
      $region41: #{encoder_block.3} parent=39 // pred_check
        %p293 = pneg %p122
      $region42: #{encoder_block.3} parent=39 // pred_check_branch
        %295 = sbr.rel (%p293) target = $region44
      $region43: #{encoder_block.3} parent=39 // pred_region
        %s296 = smul.u32 8, %s21
        %p297 = scmp.lt.s32.totalorder %s20, 1
        %s298 = scalar_select %p297, %s20, 1
        %p299 = scmp.lt.s32.totalorder %s296, 7
        %s300 = scalar_select %p299, %s296, 7
        %s301 = smul.addr %s298, 8
        %s302 = sadd.s32 %s300, %s301
        %s303 = smul.addr %s302, 8
        %s304 = scalar_lea.vmem %s3, %s303
      $region44: #{encoder_block.3} parent=39 // pred_fallthru
        _
    $region40: #{encoder_block.3} parent=5 // pred_fallthru
      _
  $region6: #{encoder_block.3} parent=0 // loop_footer
    %s13 = sadd.s32 1, %s9
  $region7: #{encoder_block.3} parent=0 // loop_footer_branch
    %8 = sbr.rel target = $region3
  $region8: #{encoder_block.3} parent=0 // loop_exit
    _

// kernel: encoder_block.2
$region0: #{encoder_block.2}
  #allocation0 [shape = 'u32[]', space=smem, size = 0x4, offset = 0x4, fixed_abs, tag = 'smem constant byte address 0x4 - core index']
  #allocation1 [shape = 'u32[72,128]{1,0:T(1,128)}', space=vmem, size = 0x9000, scoped, tag = 'internal scratch']
  #allocation2 [shape = 'bf16[192,16]{1,0:T(8,128)(2,1)}', space=vmem, size = 0xc000, scoped, tag = 'scratch operand']
  #allocation3 [shape = 'f32[192,16]{1,0:T(8,128)}', space=vmem, size = 0x18000, scoped, tag = 'scratch operand']
  #allocation4 [shape = 'bf16[128,144]{1,0:T(8,128)(2,1)}', space=vmem, size = 0x10000, scoped, tag = 'scratch operand']
  %s0 = inlined_call_operand.vmem [shape: bf16[2,192,16], index: 0, kind: input, shape index: {}, may-alias: {0,1}]
  %s1 = inlined_call_operand.vmem [shape: bf16[2,192,16], index: 1, kind: input, shape index: {}, may-alias: {0,1}]
  %s2 = inlined_call_operand.vmem [shape: bf16[144,128], index: 2, kind: input, shape index: {}]
  %s3 = inlined_call_operand.vmem [shape: f32[1,128], index: 3, kind: input, shape index: {}]
  %s4 = inlined_call_operand.vmem [shape: f32[2,8,8,8], index: 4, kind: output, shape index: {0}]
  %s5 = inlined_call_operand.vmem [shape: f32[2,1,1,128], index: 5, kind: output, shape index: {1}]
  %s6 = inlined_call_operand.vmem [shape: f32[2,1,1,128], index: 6, kind: output, shape index: {2}]
  %7 = xla_tuple %s4, %s5, %s6
  %s8 = sld [smem:[#allocation0]]
  $region65: #{encoder_block.2} parent=0
    _
  %s10 = ssub.s32 1, %s8
  %s11 = scalar_select 0, %s10, %s8
  loop: start=0, step=1, limit=4
  $region2: #{encoder_block.2} parent=0 // loop_pre_header
    _
  $region3: #{encoder_block.2} parent=0 // loop_header
    %s13 = sphi 0, %s17
    %p14 = scmp.ge.s32.totalorder %s13, 4
    %s20 = sphi 0, %s32
    %s21 = sphi 0, %s28
    %s22 = sphi 0, %s20
    %s23 = sphi 0, %s21
    %s24 = sphi 0, %s22
    %s25 = sphi 0, %s23
    %s37 = sphi 0, %s39
    %s40 = sphi 0, %s37
    %s41 = sphi 0, %s40
    %s57 = sphi 0, %s41
    %s69 = sphi 0, %s71
    %s72 = sphi 0, %s69
    %s73 = sphi 0, %s72
    %s89 = sphi 0, %s73
    %s93 = sphi 0, %s93
    %s95 = sphi 0, %s93
    %s96 = sphi 0, %s95
    %s110 = sphi 0, %s96
    %s114 = sphi 0, %s114
    %s116 = sphi 0, %s114
    %s117 = sphi 0, %s116
    %s131 = sphi 0, %s117
    %s139 = sphi 0, %s141
    %s142 = sphi 0, %s139
    %s143 = sphi 0, %s142
    %s159 = sphi 0, %s143
    %s167 = sphi 0, %s169
    %s170 = sphi 0, %s167
    %s171 = sphi 0, %s170
    %s187 = sphi 0, %s171
    %s195 = sphi 0, %s197
    %s198 = sphi 0, %s195
    %s199 = sphi 0, %s198
    %s215 = sphi 0, %s199
  $region4: #{encoder_block.2} parent=0 // loop_header_branch
    %16 = sbr.rel (%p14) target = $region8
  $region5: #{encoder_block.2} parent=0 // loop_body
    %s18 = ssub.s32 %s13, 1
    %s19 = ssub.s32 %s13, 2
    %s26 = sadd.s32 1, %s21
    %p27 = scmp.ge.s32.totalorder %s26, 1
    %s28 = scalar_select %p27, 0, %s26
    %s29 = sadd.s32 1, %s20
    %s30 = scalar_select %p27, %s29, %s20
    %p31 = scmp.ge.s32.totalorder %s30, 2
    %s32 = scalar_select %p31, 0, %s30
    %s33 = ssub.s32 %s20, %s32
    %s34 = ssub.s32 %s21, %s28
    %s35 = sor.u32 %s33, %s34
    %p36 = scmp.eq.s32.totalorder %s35, 0
    %s38 = sadd.s32 %s37, 1
    %s39 = scalar_select %p36, %s37, %s38
    %p42 = pneg %p36
    %p43 = scmp.eq.s32.totalorder %s13, 1
    %p44 = por %p42, %p43
    %p45 = scmp.ne.s32.totalorder %s37, %s40
    %p46 = scmp.eq.s32.totalorder %s13, 0
    %p47 = por %p45, %p46
    %p48 = scmp.ne.s32.totalorder %s37, %s40
    %p49 = scmp.eq.s32.totalorder %s18, 1
    %p50 = por %p48, %p49
    %p51 = scmp.ne.s32.totalorder %s40, %s41
    %p52 = scmp.eq.s32.totalorder %s18, 0
    %p53 = por %p51, %p52
    %p54 = scmp.ne.s32.totalorder %s40, %s41
    %p55 = scmp.eq.s32.totalorder %s19, 1
    %p56 = por %p54, %p55
    %p58 = scmp.ne.s32.totalorder %s41, %s57
    %p59 = scmp.eq.s32.totalorder %s19, 0
    %p60 = por %p58, %p59
    %s61 = sadd.s32 %s21, 1
    %s62 = smul.u32 %s61, 2
    %s63 = sadd.s32 %s28, 1
    %s64 = smul.u32 %s63, 2
    %s65 = ssub.s32 %s20, %s32
    %s66 = ssub.s32 %s62, %s64
    %s67 = sor.u32 %s65, %s66
    %p68 = scmp.eq.s32.totalorder %s67, 0
    %s70 = sadd.s32 %s69, 1
    %s71 = scalar_select %p68, %s69, %s70
    %p74 = pneg %p68
    %p75 = scmp.eq.s32.totalorder %s13, 1
    %p76 = por %p74, %p75
    %p77 = scmp.ne.s32.totalorder %s69, %s72
    %p78 = scmp.eq.s32.totalorder %s13, 0
    %p79 = por %p77, %p78
    %p80 = scmp.ne.s32.totalorder %s69, %s72
    %p81 = scmp.eq.s32.totalorder %s18, 1
    %p82 = por %p80, %p81
    %p83 = scmp.ne.s32.totalorder %s72, %s73
    %p84 = scmp.eq.s32.totalorder %s18, 0
    %p85 = por %p83, %p84
    %p86 = scmp.ne.s32.totalorder %s72, %s73
    %p87 = scmp.eq.s32.totalorder %s19, 1
    %p88 = por %p86, %p87
    %p90 = scmp.ne.s32.totalorder %s73, %s89
    %p91 = scmp.eq.s32.totalorder %s19, 0
    %p92 = por %p90, %p91
    %s94 = sadd.s32 %s93, 1
    %p97 = scmp.eq.s32.totalorder %s13, 1
    %p98 = scmp.ne.s32.totalorder %s93, %s95
    %p99 = scmp.eq.s32.totalorder %s13, 0
    %p100 = por %p98, %p99
    %p101 = scmp.ne.s32.totalorder %s93, %s95
    %p102 = scmp.eq.s32.totalorder %s18, 1
    %p103 = por %p101, %p102
    %p104 = scmp.ne.s32.totalorder %s95, %s96
    %p105 = scmp.eq.s32.totalorder %s18, 0
    %p106 = por %p104, %p105
    %p107 = scmp.ne.s32.totalorder %s95, %s96
    %p108 = scmp.eq.s32.totalorder %s19, 1
    %p109 = por %p107, %p108
    %p111 = scmp.ne.s32.totalorder %s96, %s110
    %p112 = scmp.eq.s32.totalorder %s19, 0
    %p113 = por %p111, %p112
    %s115 = sadd.s32 %s114, 1
    %p118 = scmp.eq.s32.totalorder %s13, 1
    %p119 = scmp.ne.s32.totalorder %s114, %s116
    %p120 = scmp.eq.s32.totalorder %s13, 0
    %p121 = por %p119, %p120
    %p122 = scmp.ne.s32.totalorder %s114, %s116
    %p123 = scmp.eq.s32.totalorder %s18, 1
    %p124 = por %p122, %p123
    %p125 = scmp.ne.s32.totalorder %s116, %s117
    %p126 = scmp.eq.s32.totalorder %s18, 0
    %p127 = por %p125, %p126
    %p128 = scmp.ne.s32.totalorder %s116, %s117
    %p129 = scmp.eq.s32.totalorder %s19, 1
    %p130 = por %p128, %p129
    %p132 = scmp.ne.s32.totalorder %s117, %s131
    %p133 = scmp.eq.s32.totalorder %s19, 0
    %p134 = por %p132, %p133
    %s135 = ssub.s32 %s20, %s32
    %s136 = ssub.s32 %s21, %s28
    %s137 = sor.u32 %s135, %s136
    %p138 = scmp.eq.s32.totalorder %s137, 0
    %s140 = sadd.s32 %s139, 1
    %s141 = scalar_select %p138, %s139, %s140
    %p144 = pneg %p138
    %p145 = scmp.eq.s32.totalorder %s13, 1
    %p146 = por %p144, %p145
    %p147 = scmp.ne.s32.totalorder %s139, %s142
    %p148 = scmp.eq.s32.totalorder %s13, 0
    %p149 = por %p147, %p148
    %p150 = scmp.ne.s32.totalorder %s139, %s142
    %p151 = scmp.eq.s32.totalorder %s18, 1
    %p152 = por %p150, %p151
    %p153 = scmp.ne.s32.totalorder %s142, %s143
    %p154 = scmp.eq.s32.totalorder %s18, 0
    %p155 = por %p153, %p154
    %p156 = scmp.ne.s32.totalorder %s142, %s143
    %p157 = scmp.eq.s32.totalorder %s19, 1
    %p158 = por %p156, %p157
    %p160 = scmp.ne.s32.totalorder %s143, %s159
    %p161 = scmp.eq.s32.totalorder %s19, 0
    %p162 = por %p160, %p161
    %s163 = ssub.s32 %s20, %s32
    %s164 = ssub.s32 %s21, %s28
    %s165 = sor.u32 %s163, %s164
    %p166 = scmp.eq.s32.totalorder %s165, 0
    %s168 = sadd.s32 %s167, 1
    %s169 = scalar_select %p166, %s167, %s168
    %p172 = pneg %p166
    %p173 = scmp.eq.s32.totalorder %s13, 1
    %p174 = por %p172, %p173
    %p175 = scmp.ne.s32.totalorder %s167, %s170
    %p176 = scmp.eq.s32.totalorder %s13, 0
    %p177 = por %p175, %p176
    %p178 = scmp.ne.s32.totalorder %s167, %s170
    %p179 = scmp.eq.s32.totalorder %s18, 1
    %p180 = por %p178, %p179
    %p181 = scmp.ne.s32.totalorder %s170, %s171
    %p182 = scmp.eq.s32.totalorder %s18, 0
    %p183 = por %p181, %p182
    %p184 = scmp.ne.s32.totalorder %s170, %s171
    %p185 = scmp.eq.s32.totalorder %s19, 1
    %p186 = por %p184, %p185
    %p188 = scmp.ne.s32.totalorder %s171, %s187
    %p189 = scmp.eq.s32.totalorder %s19, 0
    %p190 = por %p188, %p189
    %s191 = ssub.s32 %s20, %s32
    %s192 = ssub.s32 %s21, %s28
    %s193 = sor.u32 %s191, %s192
    %p194 = scmp.eq.s32.totalorder %s193, 0
    %s196 = sadd.s32 %s195, 1
    %s197 = scalar_select %p194, %s195, %s196
    %p200 = pneg %p194
    %p201 = scmp.eq.s32.totalorder %s13, 1
    %p202 = por %p200, %p201
    %p203 = scmp.ne.s32.totalorder %s195, %s198
    %p204 = scmp.eq.s32.totalorder %s13, 0
    %p205 = por %p203, %p204
    %p206 = scmp.ne.s32.totalorder %s195, %s198
    %p207 = scmp.eq.s32.totalorder %s18, 1
    %p208 = por %p206, %p207
    %p209 = scmp.ne.s32.totalorder %s198, %s199
    %p210 = scmp.eq.s32.totalorder %s18, 0
    %p211 = por %p209, %p210
    %p212 = scmp.ne.s32.totalorder %s198, %s199
    %p213 = scmp.eq.s32.totalorder %s19, 1
    %p214 = por %p212, %p213
    %p216 = scmp.ne.s32.totalorder %s199, %s215
    %p217 = scmp.eq.s32.totalorder %s19, 0
    %p218 = por %p216, %p217
    %p219 = scmp.le.s32.totalorder 1, %s13
    %p220 = scmp.lt.s32.totalorder %s13, 3
    %p221 = pnand %p219, %p220
    %p222 = pneg %p221
    // Predicated region
    $region9: #{encoder_block.2} parent=5 // pred_check
      _
    $region10: #{encoder_block.2} parent=5 // pred_check_branch
      %224 = sbr.rel (%p221) target = $region12
    $region11: #{encoder_block.2} parent=5 // pred_region
      %s225 = ssub.s32 %s13, 1
      // Predicated region
      $region13: #{encoder_block.2} parent=11 // pred_check
        %p226 = pneg %p106
      $region14: #{encoder_block.2} parent=11 // pred_check_branch
        %228 = sbr.rel (%p226) target = $region16
      $region15: #{encoder_block.2} parent=11 // pred_region
        _
      $region16: #{encoder_block.2} parent=11 // pred_fallthru
        _
      // Predicated region
      $region17: #{encoder_block.2} parent=11 // pred_check
        %p229 = pneg %p127
      $region18: #{encoder_block.2} parent=11 // pred_check_branch
        %231 = sbr.rel (%p229) target = $region20
      $region19: #{encoder_block.2} parent=11 // pred_region
        _
      $region20: #{encoder_block.2} parent=11 // pred_fallthru
        _
    $region12: #{encoder_block.2} parent=5 // pred_fallthru
      _
    %p232 = scmp.lt.s32.totalorder %s13, 2
    // Predicated region
    $region21: #{encoder_block.2} parent=5 // pred_check
      %p233 = pneg %p232
    $region22: #{encoder_block.2} parent=5 // pred_check_branch
      %235 = sbr.rel (%p233) target = $region24
    $region23: #{encoder_block.2} parent=5 // pred_region
      // Predicated region
      $region25: #{encoder_block.2} parent=23 // pred_check
        %p236 = pneg %p47
      $region26: #{encoder_block.2} parent=23 // pred_check_branch
        %238 = sbr.rel (%p236) target = $region28
      $region27: #{encoder_block.2} parent=23 // pred_region
        %s239 = smul.u32 16, %s21
        %s240 = ssub.s32 24, %s239
        %p241 = scmp.lt.s32.totalorder %s240, 16
        %s242 = scalar_select %p241, %s240, 16
        %s243 = smul.u32 4, %s242
        %p244 = scmp.lt.s32.totalorder %s20, 1
        %s245 = scalar_select %p244, %s20, 1
        %p246 = scmp.lt.s32.totalorder %s239, 23
        %s247 = scalar_select %p246, %s239, 23
        %s248 = smul.addr %s245, 24
        %s249 = sadd.s32 %s247, %s248
        %s250 = smul.addr %s249, 4
        %s251 = scalar_lea.vmem %s0, %s250
        %s252 = smul.u32 16, %s21
        %s253 = ssub.s32 24, %s252
        %p254 = scmp.lt.s32.totalorder %s253, 16
        %s255 = scalar_select %p254, %s253, 16
        %s256 = smul.u32 4, %s255
      $region28: #{encoder_block.2} parent=23 // pred_fallthru
        _
      // Predicated region
      $region29: #{encoder_block.2} parent=23 // pred_check
        %p257 = pneg %p79
      $region30: #{encoder_block.2} parent=23 // pred_check_branch
        %259 = sbr.rel (%p257) target = $region32
      $region31: #{encoder_block.2} parent=23 // pred_region
        %s260 = sadd.s32 %s21, 1
        %s261 = smul.u32 %s260, 2
        %s262 = smul.u32 8, %s261
        %p263 = scmp.lt.s32.totalorder %s20, 1
        %s264 = scalar_select %p263, %s20, 1
        %p265 = scmp.lt.s32.totalorder %s262, 23
        %s266 = scalar_select %p265, %s262, 23
        %s267 = smul.addr %s264, 24
        %s268 = sadd.s32 %s266, %s267
        %s269 = smul.addr %s268, 4
        %s270 = scalar_lea.vmem %s1, %s269
        %s271 = sadd.s32 %s21, 1
        %s272 = smul.u32 %s271, 2
        %s273 = smul.u32 8, %s272
      $region32: #{encoder_block.2} parent=23 // pred_fallthru
        _
    $region24: #{encoder_block.2} parent=5 // pred_fallthru
      _
    %p274 = scmp.le.s32.totalorder 1, %s13
    %p275 = scmp.lt.s32.totalorder %s13, 3
    %p276 = pnand %p274, %p275
    %p277 = pneg %p276
    // Predicated region
    $region33: #{encoder_block.2} parent=5 // pred_check
      _
    $region34: #{encoder_block.2} parent=5 // pred_check_branch
      %279 = sbr.rel (%p276) target = $region36
    $region35: #{encoder_block.2} parent=5 // pred_region
      %s280 = ssub.s32 %s13, 1
      %s281 = smul.u32 16, %s23
      %s282 = ssub.s32 24, %s281
      %p283 = scmp.lt.s32.totalorder %s282, 16
      %s284 = scalar_select %p283, %s282, 16
      %s285 = smul.u32 4, %s284
      %p286 = scmp.lt.s32.totalorder %s22, 1
      %s287 = scalar_select %p286, %s22, 1
      %p288 = scmp.lt.s32.totalorder %s281, 23
      %s289 = scalar_select %p288, %s281, 23
      %s290 = smul.addr %s287, 24
      %s291 = sadd.s32 %s289, %s290
      %s292 = smul.addr %s291, 4
      %s293 = scalar_lea.vmem %s0, %s292
      %p294 = pneg %p53
      %p295 = pneg %p50
      %s296 = sadd.s32 %s23, 1
      %s297 = smul.u32 %s296, 2
      %s298 = smul.u32 8, %s297
      %p299 = scmp.lt.s32.totalorder %s22, 1
      %s300 = scalar_select %p299, %s22, 1
      %p301 = scmp.lt.s32.totalorder %s298, 23
      %s302 = scalar_select %p301, %s298, 23
      %s303 = smul.addr %s300, 24
      %s304 = sadd.s32 %s302, %s303
      %s305 = smul.addr %s304, 4
      %s306 = scalar_lea.vmem %s1, %s305
      %p307 = pneg %p85
      %p308 = pneg %p82
      %p309 = pneg %p106
      %p310 = pneg %p103
      %p311 = pneg %p127
      %p312 = pneg %p124
      %p313 = pneg %p155
      %p314 = pneg %p152
      %s315 = smul.u32 8, %s23
      %p316 = scmp.lt.s32.totalorder %s22, 1
      %s317 = scalar_select %p316, %s22, 1
      %p318 = scmp.lt.s32.totalorder %s315, 7
      %s319 = scalar_select %p318, %s315, 7
      %s320 = smul.addr %s317, 8
      %s321 = sadd.s32 %s319, %s320
      %s322 = smul.addr %s321, 8
      %s323 = scalar_lea.vmem %s4, %s322
      %p324 = pneg %p183
      %p325 = pneg %p180
      %p326 = scmp.lt.s32.totalorder %s22, 1
      %s327 = scalar_select %p326, %s22, 1
      %p328 = scmp.lt.s32.totalorder %s23, 0
      %s329 = scalar_select %p328, %s23, 0
      %s330 = sadd.s32 %s329, %s327
      %s331 = scalar_lea.vmem %s5, %s330
      %p332 = pneg %p211
      %p333 = pneg %p208
      %p334 = scmp.lt.s32.totalorder %s22, 1
      %s335 = scalar_select %p334, %s22, 1
      %p336 = scmp.lt.s32.totalorder %s23, 0
      %s337 = scalar_select %p336, %s23, 0
      %s338 = sadd.s32 %s337, %s335
      %s339 = scalar_lea.vmem %s6, %s338
      %s340 = smul.u32 16, %s23
      %s341 = ssub.s32 24, %s340
      %p342 = scmp.lt.s32.totalorder %s341, 16
      %s343 = scalar_select %p342, %s341, 16
      %s344 = smul.u32 4, %s343
      %p345 = scmp.lt.s32.totalorder %s22, 1
      %s346 = scalar_select %p345, %s22, 1
      %p347 = scmp.lt.s32.totalorder %s340, 23
      %s348 = scalar_select %p347, %s340, 23
      %s349 = smul.addr %s346, 24
      %s350 = sadd.s32 %s348, %s349
      %s351 = smul.addr %s350, 4
      %s352 = scalar_lea.vmem %s0, %s351
      %s353 = smul.u32 16, %s23
      %s354 = ssub.s32 24, %s353
      %p355 = scmp.lt.s32.totalorder %s354, 16
      %s356 = scalar_select %p355, %s354, 16
      %s357 = smul.u32 4, %s356
      %s358 = sadd.s32 %s23, 1
      %s359 = smul.u32 %s358, 2
      %s360 = smul.u32 8, %s359
      %p361 = scmp.lt.s32.totalorder %s22, 1
      %s362 = scalar_select %p361, %s22, 1
      %p363 = scmp.lt.s32.totalorder %s360, 23
      %s364 = scalar_select %p363, %s360, 23
      %s365 = smul.addr %s362, 24
      %s366 = sadd.s32 %s364, %s365
      %s367 = smul.addr %s366, 4
      %s368 = scalar_lea.vmem %s1, %s367
      %s369 = sadd.s32 %s23, 1
      %s370 = smul.u32 %s369, 2
      %s371 = smul.u32 8, %s370
      %s372 = smul.u32 8, %s23
      %p373 = scmp.lt.s32.totalorder %s22, 1
      %s374 = scalar_select %p373, %s22, 1
      %p375 = scmp.lt.s32.totalorder %s372, 7
      %s376 = scalar_select %p375, %s372, 7
      %s377 = smul.addr %s374, 8
      %s378 = sadd.s32 %s376, %s377
      %s379 = smul.addr %s378, 8
      %s380 = scalar_lea.vmem %s4, %s379
      %s381 = smul.u32 8, %s23
      %p382 = scmp.lt.s32.totalorder %s22, 1
      %s383 = scalar_select %p382, %s22, 1
      %p384 = scmp.lt.s32.totalorder %s23, 0
      %s385 = scalar_select %p384, %s23, 0
      %s386 = sadd.s32 %s385, %s383
      %s387 = scalar_lea.vmem %s5, %s386
      %p388 = scmp.lt.s32.totalorder %s22, 1
      %s389 = scalar_select %p388, %s22, 1
      %p390 = scmp.lt.s32.totalorder %s23, 0
      %s391 = scalar_select %p390, %s23, 0
      %s392 = sadd.s32 %s391, %s389
      %s393 = scalar_lea.vmem %s6, %s392
      %v395 = vld [vmem:[%s352] sm:$0xf]
      %v396 = vld [vmem:[%s352 + $0x4] sm:$0xf]
      %v397 = vld [vmem:[%s352 + $0x8] sm:$0xf]
      %v398 = vld [vmem:[%s352 + $0xc] sm:$0xf]
      %v399 = vld [vmem:[%s352 + $0x10] sm:$0xf]
      %v400 = vld [vmem:[%s352 + $0x14] sm:$0xf]
      %v401 = vld [vmem:[%s352 + $0x18] sm:$0xf]
      %v402 = vld [vmem:[%s352 + $0x1c] sm:$0xf]
      %v403 = vld [vmem:[%s352 + $0x20] sm:$0xf]
      %v404 = vld [vmem:[%s352 + $0x24] sm:$0xf]
      %v405 = vld [vmem:[%s352 + $0x28] sm:$0xf]
      %v406 = vld [vmem:[%s352 + $0x2c] sm:$0xf]
      %v407 = vld [vmem:[%s352 + $0x30] sm:$0xf]
      %v408 = vld [vmem:[%s352 + $0x34] sm:$0xf]
      %v409 = vld [vmem:[%s352 + $0x38] sm:$0xf]
      %v410 = vld [vmem:[%s352 + $0x3c] sm:$0xf]
      %v411 = vld [vmem:[%s368] sm:$0xf]
      %v412 = vld [vmem:[%s368 + $0x4] sm:$0xf]
      %v413 = vld [vmem:[%s368 + $0x8] sm:$0xf]
      %v414 = vld [vmem:[%s368 + $0xc] sm:$0xf]
      %v415 = vld [vmem:[%s368 + $0x10] sm:$0xf]
      %v416 = vld [vmem:[%s368 + $0x14] sm:$0xf]
      %v417 = vld [vmem:[%s368 + $0x18] sm:$0xf]
      %v418 = vld [vmem:[%s368 + $0x1c] sm:$0xf]
      %vm419 = vcmask 125952
      %420 = vst.msk [vmem:[#allocation2] sm:$0xf] %vm419, %v395
      %421 = vst.msk [vmem:[#allocation2 + $0x4] sm:$0xf] %vm419, %v396
      %422 = vst.msk [vmem:[#allocation2 + $0x8] sm:$0xf] %vm419, %v397
      %423 = vst.msk [vmem:[#allocation2 + $0xc] sm:$0xf] %vm419, %v398
      %424 = vst.msk [vmem:[#allocation2 + $0x10] sm:$0xf] %vm419, %v399
      %425 = vst.msk [vmem:[#allocation2 + $0x14] sm:$0xf] %vm419, %v400
      %426 = vst.msk [vmem:[#allocation2 + $0x18] sm:$0xf] %vm419, %v401
      %427 = vst.msk [vmem:[#allocation2 + $0x1c] sm:$0xf] %vm419, %v402
      %428 = vst.msk [vmem:[#allocation2 + $0x20] sm:$0xf] %vm419, %v403
      %429 = vst.msk [vmem:[#allocation2 + $0x24] sm:$0xf] %vm419, %v404
      %430 = vst.msk [vmem:[#allocation2 + $0x28] sm:$0xf] %vm419, %v405
      %431 = vst.msk [vmem:[#allocation2 + $0x2c] sm:$0xf] %vm419, %v406
      %432 = vst.msk [vmem:[#allocation2 + $0x30] sm:$0xf] %vm419, %v407
      %433 = vst.msk [vmem:[#allocation2 + $0x34] sm:$0xf] %vm419, %v408
      %434 = vst.msk [vmem:[#allocation2 + $0x38] sm:$0xf] %vm419, %v409
      %435 = vst.msk [vmem:[#allocation2 + $0x3c] sm:$0xf] %vm419, %v410
      %436 = vst.msk [vmem:[#allocation2 + $0x40] sm:$0xf] %vm419, %v411
      %437 = vst.msk [vmem:[#allocation2 + $0x44] sm:$0xf] %vm419, %v412
      %438 = vst.msk [vmem:[#allocation2 + $0x48] sm:$0xf] %vm419, %v413
      %439 = vst.msk [vmem:[#allocation2 + $0x4c] sm:$0xf] %vm419, %v414
      %440 = vst.msk [vmem:[#allocation2 + $0x50] sm:$0xf] %vm419, %v415
      %441 = vst.msk [vmem:[#allocation2 + $0x54] sm:$0xf] %vm419, %v416
      %442 = vst.msk [vmem:[#allocation2 + $0x58] sm:$0xf] %vm419, %v417
      %443 = vst.msk [vmem:[#allocation2 + $0x5c] sm:$0xf] %vm419, %v418
      %v444 = vunpack.c.l.bf16 %v395
      %v445 = vunpack.c.l.bf16 %v396
      %v446 = vunpack.c.l.bf16 %v397
      %v447 = vunpack.c.l.bf16 %v398
      %v448 = vunpack.c.l.bf16 %v399
      %v449 = vunpack.c.l.bf16 %v400
      %v450 = vunpack.c.l.bf16 %v401
      %v451 = vunpack.c.l.bf16 %v402
      %v452 = vunpack.c.l.bf16 %v403
      %v453 = vunpack.c.l.bf16 %v404
      %v454 = vunpack.c.l.bf16 %v405
      %v455 = vunpack.c.l.bf16 %v406
      %v456 = vunpack.c.l.bf16 %v407
      %v457 = vunpack.c.l.bf16 %v408
      %v458 = vunpack.c.l.bf16 %v409
      %v459 = vunpack.c.l.bf16 %v410
      %vm460 = vcmask 130048
      %461 = vst.msk [vmem:[#allocation3] sm:$0xff] %vm460, %v444
      %462 = vst.msk [vmem:[#allocation3 + $0x8] sm:$0xff] %vm460, %v445
      %463 = vst.msk [vmem:[#allocation3 + $0x10] sm:$0xff] %vm460, %v446
      %464 = vst.msk [vmem:[#allocation3 + $0x18] sm:$0xff] %vm460, %v447
      %465 = vst.msk [vmem:[#allocation3 + $0x20] sm:$0xff] %vm460, %v448
      %466 = vst.msk [vmem:[#allocation3 + $0x28] sm:$0xff] %vm460, %v449
      %467 = vst.msk [vmem:[#allocation3 + $0x30] sm:$0xff] %vm460, %v450
      %468 = vst.msk [vmem:[#allocation3 + $0x38] sm:$0xff] %vm460, %v451
      %469 = vst.msk [vmem:[#allocation3 + $0x40] sm:$0xff] %vm460, %v452
      %470 = vst.msk [vmem:[#allocation3 + $0x48] sm:$0xff] %vm460, %v453
      %471 = vst.msk [vmem:[#allocation3 + $0x50] sm:$0xff] %vm460, %v454
      %472 = vst.msk [vmem:[#allocation3 + $0x58] sm:$0xff] %vm460, %v455
      %473 = vst.msk [vmem:[#allocation3 + $0x60] sm:$0xff] %vm460, %v456
      %474 = vst.msk [vmem:[#allocation3 + $0x68] sm:$0xff] %vm460, %v457
      %475 = vst.msk [vmem:[#allocation3 + $0x70] sm:$0xff] %vm460, %v458
      %476 = vst.msk [vmem:[#allocation3 + $0x78] sm:$0xff] %vm460, %v459
      %v477 = vunpack.c.l.bf16 %v411
      %v478 = vunpack.c.l.bf16 %v412
      %v479 = vunpack.c.l.bf16 %v413
      %v480 = vunpack.c.l.bf16 %v414
      %v481 = vunpack.c.l.bf16 %v415
      %v482 = vunpack.c.l.bf16 %v416
      %v483 = vunpack.c.l.bf16 %v417
      %v484 = vunpack.c.l.bf16 %v418
      %485 = vst.msk [vmem:[#allocation3 + $0x80] sm:$0xff] %vm460, %v477
      %486 = vst.msk [vmem:[#allocation3 + $0x88] sm:$0xff] %vm460, %v478
      %487 = vst.msk [vmem:[#allocation3 + $0x90] sm:$0xff] %vm460, %v479
      %488 = vst.msk [vmem:[#allocation3 + $0x98] sm:$0xff] %vm460, %v480
      %489 = vst.msk [vmem:[#allocation3 + $0xa0] sm:$0xff] %vm460, %v481
      %490 = vst.msk [vmem:[#allocation3 + $0xa8] sm:$0xff] %vm460, %v482
      %491 = vst.msk [vmem:[#allocation3 + $0xb0] sm:$0xff] %vm460, %v483
      %492 = vst.msk [vmem:[#allocation3 + $0xb8] sm:$0xff] %vm460, %v484
      %v493 = vld [vmem:[#allocation2] sm:$0xf]
      %v494 = vld [vmem:[#allocation2 + $0x4] sm:$0xf]
      %v495 = vld [vmem:[#allocation2 + $0x8] sm:$0xf]
      %v496 = vld [vmem:[#allocation2 + $0xc] sm:$0xf]
      %v497 = vld [vmem:[#allocation2 + $0x10] sm:$0xf]
      %v498 = vld [vmem:[#allocation2 + $0x14] sm:$0xf]
      %v499 = vld [vmem:[#allocation2 + $0x18] sm:$0xf]
      %v500 = vld [vmem:[#allocation2 + $0x1c] sm:$0xf]
      %v501 = vld [vmem:[#allocation2 + $0x20] sm:$0xf]
      %v502 = vld [vmem:[#allocation2 + $0x24] sm:$0xf]
      %v503 = vld [vmem:[#allocation2 + $0x28] sm:$0xf]
      %v504 = vld [vmem:[#allocation2 + $0x2c] sm:$0xf]
      %v505 = vld [vmem:[#allocation2 + $0x30] sm:$0xf]
      %v506 = vld [vmem:[#allocation2 + $0x34] sm:$0xf]
      %v507 = vld [vmem:[#allocation2 + $0x38] sm:$0xf]
      %v508 = vld [vmem:[#allocation2 + $0x3c] sm:$0xf]
      %509 = vst.msk [vmem:[#allocation4] sm:$0xf] %vm419, %v493
      %510 = vst.msk [vmem:[#allocation4 + $0x8] sm:$0xf] %vm419, %v494
      %511 = vst.msk [vmem:[#allocation4 + $0x10] sm:$0xf] %vm419, %v495
      %512 = vst.msk [vmem:[#allocation4 + $0x18] sm:$0xf] %vm419, %v496
      %513 = vst.msk [vmem:[#allocation4 + $0x20] sm:$0xf] %vm419, %v497
      %514 = vst.msk [vmem:[#allocation4 + $0x28] sm:$0xf] %vm419, %v498
      %515 = vst.msk [vmem:[#allocation4 + $0x30] sm:$0xf] %vm419, %v499
      %516 = vst.msk [vmem:[#allocation4 + $0x38] sm:$0xf] %vm419, %v500
      %517 = vst.msk [vmem:[#allocation4 + $0x40] sm:$0xf] %vm419, %v501
      %518 = vst.msk [vmem:[#allocation4 + $0x48] sm:$0xf] %vm419, %v502
      %519 = vst.msk [vmem:[#allocation4 + $0x50] sm:$0xf] %vm419, %v503
      %520 = vst.msk [vmem:[#allocation4 + $0x58] sm:$0xf] %vm419, %v504
      %521 = vst.msk [vmem:[#allocation4 + $0x60] sm:$0xf] %vm419, %v505
      %522 = vst.msk [vmem:[#allocation4 + $0x68] sm:$0xf] %vm419, %v506
      %523 = vst.msk [vmem:[#allocation4 + $0x70] sm:$0xf] %vm419, %v507
      %524 = vst.msk [vmem:[#allocation4 + $0x78] sm:$0xf] %vm419, %v508
      %v525 = vld [vmem:[#allocation3 + $0x1] sm:$0xff]
      %v526 = vld [vmem:[#allocation3 + $0x9] sm:$0xff]
      %v527 = vld [vmem:[#allocation3 + $0x11] sm:$0xff]
      %v528 = vld [vmem:[#allocation3 + $0x19] sm:$0xff]
      %v529 = vld [vmem:[#allocation3 + $0x21] sm:$0xff]
      %v530 = vld [vmem:[#allocation3 + $0x29] sm:$0xff]
      %v531 = vld [vmem:[#allocation3 + $0x31] sm:$0xff]
      %v532 = vld [vmem:[#allocation3 + $0x39] sm:$0xff]
      %v533 = vld [vmem:[#allocation3 + $0x41] sm:$0xff]
      %v534 = vld [vmem:[#allocation3 + $0x49] sm:$0xff]
      %v535 = vld [vmem:[#allocation3 + $0x51] sm:$0xff]
      %v536 = vld [vmem:[#allocation3 + $0x59] sm:$0xff]
      %v537 = vld [vmem:[#allocation3 + $0x61] sm:$0xff]
      %v538 = vld [vmem:[#allocation3 + $0x69] sm:$0xff]
      %v539 = vld [vmem:[#allocation3 + $0x71] sm:$0xff]
      %v540 = vld [vmem:[#allocation3 + $0x79] sm:$0xff]
      %v541 = vpack.c.bf16 %v525, %v525
      %v542 = vpack.c.bf16 %v526, %v526
      %v543 = vpack.c.bf16 %v527, %v527
      %v544 = vpack.c.bf16 %v528, %v528
      %v545 = vpack.c.bf16 %v529, %v529
      %v546 = vpack.c.bf16 %v530, %v530
      %v547 = vpack.c.bf16 %v531, %v531
      %v548 = vpack.c.bf16 %v532, %v532
      %v549 = vpack.c.bf16 %v533, %v533
      %v550 = vpack.c.bf16 %v534, %v534
      %v551 = vpack.c.bf16 %v535, %v535
      %v552 = vpack.c.bf16 %v536, %v536
      %v553 = vpack.c.bf16 %v537, %v537
      %v554 = vpack.c.bf16 %v538, %v538
      %v555 = vpack.c.bf16 %v539, %v539
      %v556 = vpack.c.bf16 %v540, %v540
      %573 = vrot.lane.b32.xlu0 %v541, 16
      %v574 = vpop.permute.xlu0 %573
      %575 = vrot.lane.b32.xlu0 %v542, 16
      %v576 = vpop.permute.xlu0 %575
      %577 = vrot.lane.b32.xlu0 %v543, 16
      %v578 = vpop.permute.xlu0 %577
      %579 = vrot.lane.b32.xlu0 %v544, 16
      %v580 = vpop.permute.xlu0 %579
      %581 = vrot.lane.b32.xlu0 %v545, 16
      %v582 = vpop.permute.xlu0 %581
      %583 = vrot.lane.b32.xlu0 %v546, 16
      %v584 = vpop.permute.xlu0 %583
      %585 = vrot.lane.b32.xlu0 %v547, 16
      %v586 = vpop.permute.xlu0 %585
      %587 = vrot.lane.b32.xlu0 %v548, 16
      %v588 = vpop.permute.xlu0 %587
      %589 = vrot.lane.b32.xlu0 %v549, 16
      %v590 = vpop.permute.xlu0 %589
      %591 = vrot.lane.b32.xlu0 %v550, 16
      %v592 = vpop.permute.xlu0 %591
      %593 = vrot.lane.b32.xlu0 %v551, 16
      %v594 = vpop.permute.xlu0 %593
      %595 = vrot.lane.b32.xlu0 %v552, 16
      %v596 = vpop.permute.xlu0 %595
      %597 = vrot.lane.b32.xlu0 %v553, 16
      %v598 = vpop.permute.xlu0 %597
      %599 = vrot.lane.b32.xlu0 %v554, 16
      %v600 = vpop.permute.xlu0 %599
      %601 = vrot.lane.b32.xlu0 %v555, 16
      %v602 = vpop.permute.xlu0 %601
      %603 = vrot.lane.b32.xlu0 %v556, 16
      %v604 = vpop.permute.xlu0 %603
      %vm621 = vcmask 257152
      %622 = vst.msk [vmem:[#allocation4] sm:$0xf] %vm621, %v574
      %623 = vst.msk [vmem:[#allocation4 + $0x8] sm:$0xf] %vm621, %v576
      %624 = vst.msk [vmem:[#allocation4 + $0x10] sm:$0xf] %vm621, %v578
      %625 = vst.msk [vmem:[#allocation4 + $0x18] sm:$0xf] %vm621, %v580
      %626 = vst.msk [vmem:[#allocation4 + $0x20] sm:$0xf] %vm621, %v582
      %627 = vst.msk [vmem:[#allocation4 + $0x28] sm:$0xf] %vm621, %v584
      %628 = vst.msk [vmem:[#allocation4 + $0x30] sm:$0xf] %vm621, %v586
      %629 = vst.msk [vmem:[#allocation4 + $0x38] sm:$0xf] %vm621, %v588
      %630 = vst.msk [vmem:[#allocation4 + $0x40] sm:$0xf] %vm621, %v590
      %631 = vst.msk [vmem:[#allocation4 + $0x48] sm:$0xf] %vm621, %v592
      %632 = vst.msk [vmem:[#allocation4 + $0x50] sm:$0xf] %vm621, %v594
      %633 = vst.msk [vmem:[#allocation4 + $0x58] sm:$0xf] %vm621, %v596
      %634 = vst.msk [vmem:[#allocation4 + $0x60] sm:$0xf] %vm621, %v598
      %635 = vst.msk [vmem:[#allocation4 + $0x68] sm:$0xf] %vm621, %v600
      %636 = vst.msk [vmem:[#allocation4 + $0x70] sm:$0xf] %vm621, %v602
      %637 = vst.msk [vmem:[#allocation4 + $0x78] sm:$0xf] %vm621, %v604
      %v638 = vld [vmem:[#allocation2] sm:$0xe]
      %v639 = vld [vmem:[#allocation2 + $0x4] sm:$0xf]
      %v640 = vld [vmem:[#allocation2 + $0x8] sm:$0xf]
      %v641 = vld [vmem:[#allocation2 + $0xc] sm:$0xf]
      %v642 = vld [vmem:[#allocation2 + $0x10] sm:$0xf]
      %v643 = vld [vmem:[#allocation2 + $0x14] sm:$0xf]
      %v644 = vld [vmem:[#allocation2 + $0x18] sm:$0xf]
      %v645 = vld [vmem:[#allocation2 + $0x1c] sm:$0xf]
      %v646 = vld [vmem:[#allocation2 + $0x20] sm:$0xf]
      %v647 = vld [vmem:[#allocation2 + $0x24] sm:$0xf]
      %v648 = vld [vmem:[#allocation2 + $0x28] sm:$0xf]
      %v649 = vld [vmem:[#allocation2 + $0x2c] sm:$0xf]
      %v650 = vld [vmem:[#allocation2 + $0x30] sm:$0xf]
      %v651 = vld [vmem:[#allocation2 + $0x34] sm:$0xf]
      %v652 = vld [vmem:[#allocation2 + $0x38] sm:$0xf]
      %v653 = vld [vmem:[#allocation2 + $0x3c] sm:$0xf]
      %v654 = vld [vmem:[#allocation2 + $0x40] sm:$0x1]
      %vm672 = vcmask 1042432
      %vm673 = vcmask 1046532
      %vm674 = vmor %vm672, %vm673
      %v675 = vrot.slane %v638, 5
      %v676 = vrot.slane %v675, 4
      %v677 = vrot.slane %v639, 5
      %v678 = vsel %vm674, %v676, %v677
      %v679 = vrot.slane %v677, 4
      %v680 = vrot.slane %v640, 5
      %v681 = vsel %vm674, %v679, %v680
      %v682 = vrot.slane %v680, 4
      %v683 = vrot.slane %v641, 5
      %v684 = vsel %vm674, %v682, %v683
      %v685 = vrot.slane %v683, 4
      %v686 = vrot.slane %v642, 5
      %v687 = vsel %vm674, %v685, %v686
      %v688 = vrot.slane %v686, 4
      %v689 = vrot.slane %v643, 5
      %v690 = vsel %vm674, %v688, %v689
      %v691 = vrot.slane %v689, 4
      %v692 = vrot.slane %v644, 5
      %v693 = vsel %vm674, %v691, %v692
      %v694 = vrot.slane %v692, 4
      %v695 = vrot.slane %v645, 5
      %v696 = vsel %vm674, %v694, %v695
      %v697 = vrot.slane %v695, 4
      %v698 = vrot.slane %v646, 5
      %v699 = vsel %vm674, %v697, %v698
      %v700 = vrot.slane %v698, 4
      %v701 = vrot.slane %v647, 5
      %v702 = vsel %vm674, %v700, %v701
      %v703 = vrot.slane %v701, 4
      %v704 = vrot.slane %v648, 5
      %v705 = vsel %vm674, %v703, %v704
      %v706 = vrot.slane %v704, 4
      %v707 = vrot.slane %v649, 5
      %v708 = vsel %vm674, %v706, %v707
      %v709 = vrot.slane %v707, 4
      %v710 = vrot.slane %v650, 5
      %v711 = vsel %vm674, %v709, %v710
      %v712 = vrot.slane %v710, 4
      %v713 = vrot.slane %v651, 5
      %v714 = vsel %vm674, %v712, %v713
      %v715 = vrot.slane %v713, 4
      %v716 = vrot.slane %v652, 5
      %v717 = vsel %vm674, %v715, %v716
      %v718 = vrot.slane %v716, 4
      %v719 = vrot.slane %v653, 5
      %v720 = vsel %vm674, %v718, %v719
      %v721 = vrot.slane %v719, 4
      %v722 = vrot.slane %v654, 5
      %v723 = vsel %vm674, %v721, %v722
      %724 = vrot.lane.b32.xlu0 %v678, 32
      %v725 = vpop.permute.xlu0 %724
      %726 = vrot.lane.b32.xlu0 %v681, 32
      %v727 = vpop.permute.xlu0 %726
      %728 = vrot.lane.b32.xlu0 %v684, 32
      %v729 = vpop.permute.xlu0 %728
      %730 = vrot.lane.b32.xlu0 %v687, 32
      %v731 = vpop.permute.xlu0 %730
      %732 = vrot.lane.b32.xlu0 %v690, 32
      %v733 = vpop.permute.xlu0 %732
      %734 = vrot.lane.b32.xlu0 %v693, 32
      %v735 = vpop.permute.xlu0 %734
      %736 = vrot.lane.b32.xlu0 %v696, 32
      %v737 = vpop.permute.xlu0 %736
      %738 = vrot.lane.b32.xlu0 %v699, 32
      %v739 = vpop.permute.xlu0 %738
      %740 = vrot.lane.b32.xlu0 %v702, 32
      %v741 = vpop.permute.xlu0 %740
      %742 = vrot.lane.b32.xlu0 %v705, 32
      %v743 = vpop.permute.xlu0 %742
      %744 = vrot.lane.b32.xlu0 %v708, 32
      %v745 = vpop.permute.xlu0 %744
      %746 = vrot.lane.b32.xlu0 %v711, 32
      %v747 = vpop.permute.xlu0 %746
      %748 = vrot.lane.b32.xlu0 %v714, 32
      %v749 = vpop.permute.xlu0 %748
      %750 = vrot.lane.b32.xlu0 %v717, 32
      %v751 = vpop.permute.xlu0 %750
      %752 = vrot.lane.b32.xlu0 %v720, 32
      %v753 = vpop.permute.xlu0 %752
      %754 = vrot.lane.b32.xlu0 %v723, 32
      %v755 = vpop.permute.xlu0 %754
      %vm772 = vcmask 388352
      %773 = vst.msk [vmem:[#allocation4] sm:$0xf] %vm772, %v725
      %774 = vst.msk [vmem:[#allocation4 + $0x8] sm:$0xf] %vm772, %v727
      %775 = vst.msk [vmem:[#allocation4 + $0x10] sm:$0xf] %vm772, %v729
      %776 = vst.msk [vmem:[#allocation4 + $0x18] sm:$0xf] %vm772, %v731
      %777 = vst.msk [vmem:[#allocation4 + $0x20] sm:$0xf] %vm772, %v733
      %778 = vst.msk [vmem:[#allocation4 + $0x28] sm:$0xf] %vm772, %v735
      %779 = vst.msk [vmem:[#allocation4 + $0x30] sm:$0xf] %vm772, %v737
      %780 = vst.msk [vmem:[#allocation4 + $0x38] sm:$0xf] %vm772, %v739
      %781 = vst.msk [vmem:[#allocation4 + $0x40] sm:$0xf] %vm772, %v741
      %782 = vst.msk [vmem:[#allocation4 + $0x48] sm:$0xf] %vm772, %v743
      %783 = vst.msk [vmem:[#allocation4 + $0x50] sm:$0xf] %vm772, %v745
      %784 = vst.msk [vmem:[#allocation4 + $0x58] sm:$0xf] %vm772, %v747
      %785 = vst.msk [vmem:[#allocation4 + $0x60] sm:$0xf] %vm772, %v749
      %786 = vst.msk [vmem:[#allocation4 + $0x68] sm:$0xf] %vm772, %v751
      %787 = vst.msk [vmem:[#allocation4 + $0x70] sm:$0xf] %vm772, %v753
      %788 = vst.msk [vmem:[#allocation4 + $0x78] sm:$0xf] %vm772, %v755
      %v789 = vld [vmem:[#allocation2 + $0x8] sm:$0xf]
      %v790 = vld [vmem:[#allocation2 + $0xc] sm:$0xf]
      %v791 = vld [vmem:[#allocation2 + $0x10] sm:$0xf]
      %v792 = vld [vmem:[#allocation2 + $0x14] sm:$0xf]
      %v793 = vld [vmem:[#allocation2 + $0x18] sm:$0xf]
      %v794 = vld [vmem:[#allocation2 + $0x1c] sm:$0xf]
      %v795 = vld [vmem:[#allocation2 + $0x20] sm:$0xf]
      %v796 = vld [vmem:[#allocation2 + $0x24] sm:$0xf]
      %v797 = vld [vmem:[#allocation2 + $0x28] sm:$0xf]
      %v798 = vld [vmem:[#allocation2 + $0x2c] sm:$0xf]
      %v799 = vld [vmem:[#allocation2 + $0x30] sm:$0xf]
      %v800 = vld [vmem:[#allocation2 + $0x34] sm:$0xf]
      %v801 = vld [vmem:[#allocation2 + $0x38] sm:$0xf]
      %v802 = vld [vmem:[#allocation2 + $0x3c] sm:$0xf]
      %v803 = vld [vmem:[#allocation2 + $0x40] sm:$0xf]
      %v804 = vld [vmem:[#allocation2 + $0x44] sm:$0xf]
      %821 = vrot.lane.b32.xlu0 %v789, 48
      %v822 = vpop.permute.xlu0 %821
      %823 = vrot.lane.b32.xlu0 %v790, 48
      %v824 = vpop.permute.xlu0 %823
      %825 = vrot.lane.b32.xlu0 %v791, 48
      %v826 = vpop.permute.xlu0 %825
      %827 = vrot.lane.b32.xlu0 %v792, 48
      %v828 = vpop.permute.xlu0 %827
      %829 = vrot.lane.b32.xlu0 %v793, 48
      %v830 = vpop.permute.xlu0 %829
      %831 = vrot.lane.b32.xlu0 %v794, 48
      %v832 = vpop.permute.xlu0 %831
      %833 = vrot.lane.b32.xlu0 %v795, 48
      %v834 = vpop.permute.xlu0 %833
      %835 = vrot.lane.b32.xlu0 %v796, 48
      %v836 = vpop.permute.xlu0 %835
      %837 = vrot.lane.b32.xlu0 %v797, 48
      %v838 = vpop.permute.xlu0 %837
      %839 = vrot.lane.b32.xlu0 %v798, 48
      %v840 = vpop.permute.xlu0 %839
      %841 = vrot.lane.b32.xlu0 %v799, 48
      %v842 = vpop.permute.xlu0 %841
      %843 = vrot.lane.b32.xlu0 %v800, 48
      %v844 = vpop.permute.xlu0 %843
      %845 = vrot.lane.b32.xlu0 %v801, 48
      %v846 = vpop.permute.xlu0 %845
      %847 = vrot.lane.b32.xlu0 %v802, 48
      %v848 = vpop.permute.xlu0 %847
      %849 = vrot.lane.b32.xlu0 %v803, 48
      %v850 = vpop.permute.xlu0 %849
      %851 = vrot.lane.b32.xlu0 %v804, 48
      %v852 = vpop.permute.xlu0 %851
      %vm869 = vcmask 519552
      %870 = vst.msk [vmem:[#allocation4] sm:$0xf] %vm869, %v822
      %871 = vst.msk [vmem:[#allocation4 + $0x8] sm:$0xf] %vm869, %v824
      %872 = vst.msk [vmem:[#allocation4 + $0x10] sm:$0xf] %vm869, %v826
      %873 = vst.msk [vmem:[#allocation4 + $0x18] sm:$0xf] %vm869, %v828
      %874 = vst.msk [vmem:[#allocation4 + $0x20] sm:$0xf] %vm869, %v830
      %875 = vst.msk [vmem:[#allocation4 + $0x28] sm:$0xf] %vm869, %v832
      %876 = vst.msk [vmem:[#allocation4 + $0x30] sm:$0xf] %vm869, %v834
      %877 = vst.msk [vmem:[#allocation4 + $0x38] sm:$0xf] %vm869, %v836
      %878 = vst.msk [vmem:[#allocation4 + $0x40] sm:$0xf] %vm869, %v838
      %879 = vst.msk [vmem:[#allocation4 + $0x48] sm:$0xf] %vm869, %v840
      %880 = vst.msk [vmem:[#allocation4 + $0x50] sm:$0xf] %vm869, %v842
      %881 = vst.msk [vmem:[#allocation4 + $0x58] sm:$0xf] %vm869, %v844
      %882 = vst.msk [vmem:[#allocation4 + $0x60] sm:$0xf] %vm869, %v846
      %883 = vst.msk [vmem:[#allocation4 + $0x68] sm:$0xf] %vm869, %v848
      %884 = vst.msk [vmem:[#allocation4 + $0x70] sm:$0xf] %vm869, %v850
      %885 = vst.msk [vmem:[#allocation4 + $0x78] sm:$0xf] %vm869, %v852
      %v886 = vld [vmem:[#allocation3 + $0x11] sm:$0xff]
      %v887 = vld [vmem:[#allocation3 + $0x19] sm:$0xff]
      %v888 = vld [vmem:[#allocation3 + $0x21] sm:$0xff]
      %v889 = vld [vmem:[#allocation3 + $0x29] sm:$0xff]
      %v890 = vld [vmem:[#allocation3 + $0x31] sm:$0xff]
      %v891 = vld [vmem:[#allocation3 + $0x39] sm:$0xff]
      %v892 = vld [vmem:[#allocation3 + $0x41] sm:$0xff]
      %v893 = vld [vmem:[#allocation3 + $0x49] sm:$0xff]
      %v894 = vld [vmem:[#allocation3 + $0x51] sm:$0xff]
      %v895 = vld [vmem:[#allocation3 + $0x59] sm:$0xff]
      %v896 = vld [vmem:[#allocation3 + $0x61] sm:$0xff]
      %v897 = vld [vmem:[#allocation3 + $0x69] sm:$0xff]
      %v898 = vld [vmem:[#allocation3 + $0x71] sm:$0xff]
      %v899 = vld [vmem:[#allocation3 + $0x79] sm:$0xff]
      %v900 = vld [vmem:[#allocation3 + $0x81] sm:$0xff]
      %v901 = vld [vmem:[#allocation3 + $0x89] sm:$0xff]
      %v902 = vpack.c.bf16 %v886, %v886
      %v903 = vpack.c.bf16 %v887, %v887
      %v904 = vpack.c.bf16 %v888, %v888
      %v905 = vpack.c.bf16 %v889, %v889
      %v906 = vpack.c.bf16 %v890, %v890
      %v907 = vpack.c.bf16 %v891, %v891
      %v908 = vpack.c.bf16 %v892, %v892
      %v909 = vpack.c.bf16 %v893, %v893
      %v910 = vpack.c.bf16 %v894, %v894
      %v911 = vpack.c.bf16 %v895, %v895
      %v912 = vpack.c.bf16 %v896, %v896
      %v913 = vpack.c.bf16 %v897, %v897
      %v914 = vpack.c.bf16 %v898, %v898
      %v915 = vpack.c.bf16 %v899, %v899
      %v916 = vpack.c.bf16 %v900, %v900
      %v917 = vpack.c.bf16 %v901, %v901
      %934 = vrot.lane.b32.xlu0 %v902, 64
      %v935 = vpop.permute.xlu0 %934
      %936 = vrot.lane.b32.xlu0 %v903, 64
      %v937 = vpop.permute.xlu0 %936
      %938 = vrot.lane.b32.xlu0 %v904, 64
      %v939 = vpop.permute.xlu0 %938
      %940 = vrot.lane.b32.xlu0 %v905, 64
      %v941 = vpop.permute.xlu0 %940
      %942 = vrot.lane.b32.xlu0 %v906, 64
      %v943 = vpop.permute.xlu0 %942
      %944 = vrot.lane.b32.xlu0 %v907, 64
      %v945 = vpop.permute.xlu0 %944
      %946 = vrot.lane.b32.xlu0 %v908, 64
      %v947 = vpop.permute.xlu0 %946
      %948 = vrot.lane.b32.xlu0 %v909, 64
      %v949 = vpop.permute.xlu0 %948
      %950 = vrot.lane.b32.xlu0 %v910, 64
      %v951 = vpop.permute.xlu0 %950
      %952 = vrot.lane.b32.xlu0 %v911, 64
      %v953 = vpop.permute.xlu0 %952
      %954 = vrot.lane.b32.xlu0 %v912, 64
      %v955 = vpop.permute.xlu0 %954
      %956 = vrot.lane.b32.xlu0 %v913, 64
      %v957 = vpop.permute.xlu0 %956
      %958 = vrot.lane.b32.xlu0 %v914, 64
      %v959 = vpop.permute.xlu0 %958
      %960 = vrot.lane.b32.xlu0 %v915, 64
      %v961 = vpop.permute.xlu0 %960
      %962 = vrot.lane.b32.xlu0 %v916, 64
      %v963 = vpop.permute.xlu0 %962
      %964 = vrot.lane.b32.xlu0 %v917, 64
      %v965 = vpop.permute.xlu0 %964
      %vm982 = vcmask 650752
      %983 = vst.msk [vmem:[#allocation4] sm:$0xf] %vm982, %v935
      %984 = vst.msk [vmem:[#allocation4 + $0x8] sm:$0xf] %vm982, %v937
      %985 = vst.msk [vmem:[#allocation4 + $0x10] sm:$0xf] %vm982, %v939
      %986 = vst.msk [vmem:[#allocation4 + $0x18] sm:$0xf] %vm982, %v941
      %987 = vst.msk [vmem:[#allocation4 + $0x20] sm:$0xf] %vm982, %v943
      %988 = vst.msk [vmem:[#allocation4 + $0x28] sm:$0xf] %vm982, %v945
      %989 = vst.msk [vmem:[#allocation4 + $0x30] sm:$0xf] %vm982, %v947
      %990 = vst.msk [vmem:[#allocation4 + $0x38] sm:$0xf] %vm982, %v949
      %991 = vst.msk [vmem:[#allocation4 + $0x40] sm:$0xf] %vm982, %v951
      %992 = vst.msk [vmem:[#allocation4 + $0x48] sm:$0xf] %vm982, %v953
      %993 = vst.msk [vmem:[#allocation4 + $0x50] sm:$0xf] %vm982, %v955
      %994 = vst.msk [vmem:[#allocation4 + $0x58] sm:$0xf] %vm982, %v957
      %995 = vst.msk [vmem:[#allocation4 + $0x60] sm:$0xf] %vm982, %v959
      %996 = vst.msk [vmem:[#allocation4 + $0x68] sm:$0xf] %vm982, %v961
      %997 = vst.msk [vmem:[#allocation4 + $0x70] sm:$0xf] %vm982, %v963
      %998 = vst.msk [vmem:[#allocation4 + $0x78] sm:$0xf] %vm982, %v965
      %v999 = vld [vmem:[#allocation2 + $0x8] sm:$0xe]
      %v1000 = vld [vmem:[#allocation2 + $0xc] sm:$0xf]
      %v1001 = vld [vmem:[#allocation2 + $0x10] sm:$0xf]
      %v1002 = vld [vmem:[#allocation2 + $0x14] sm:$0xf]
      %v1003 = vld [vmem:[#allocation2 + $0x18] sm:$0xf]
      %v1004 = vld [vmem:[#allocation2 + $0x1c] sm:$0xf]
      %v1005 = vld [vmem:[#allocation2 + $0x20] sm:$0xf]
      %v1006 = vld [vmem:[#allocation2 + $0x24] sm:$0xf]
      %v1007 = vld [vmem:[#allocation2 + $0x28] sm:$0xf]
      %v1008 = vld [vmem:[#allocation2 + $0x2c] sm:$0xf]
      %v1009 = vld [vmem:[#allocation2 + $0x30] sm:$0xf]
      %v1010 = vld [vmem:[#allocation2 + $0x34] sm:$0xf]
      %v1011 = vld [vmem:[#allocation2 + $0x38] sm:$0xf]
      %v1012 = vld [vmem:[#allocation2 + $0x3c] sm:$0xf]
      %v1013 = vld [vmem:[#allocation2 + $0x40] sm:$0xf]
      %v1014 = vld [vmem:[#allocation2 + $0x44] sm:$0xf]
      %v1015 = vld [vmem:[#allocation2 + $0x48] sm:$0x1]
      %v1033 = vrot.slane %v999, 5
      %v1034 = vrot.slane %v1033, 4
      %v1035 = vrot.slane %v1000, 5
      %v1036 = vsel %vm674, %v1034, %v1035
      %v1037 = vrot.slane %v1035, 4
      %v1038 = vrot.slane %v1001, 5
      %v1039 = vsel %vm674, %v1037, %v1038
      %v1040 = vrot.slane %v1038, 4
      %v1041 = vrot.slane %v1002, 5
      %v1042 = vsel %vm674, %v1040, %v1041
      %v1043 = vrot.slane %v1041, 4
      %v1044 = vrot.slane %v1003, 5
      %v1045 = vsel %vm674, %v1043, %v1044
      %v1046 = vrot.slane %v1044, 4
      %v1047 = vrot.slane %v1004, 5
      %v1048 = vsel %vm674, %v1046, %v1047
      %v1049 = vrot.slane %v1047, 4
      %v1050 = vrot.slane %v1005, 5
      %v1051 = vsel %vm674, %v1049, %v1050
      %v1052 = vrot.slane %v1050, 4
      %v1053 = vrot.slane %v1006, 5
      %v1054 = vsel %vm674, %v1052, %v1053
      %v1055 = vrot.slane %v1053, 4
      %v1056 = vrot.slane %v1007, 5
      %v1057 = vsel %vm674, %v1055, %v1056
      %v1058 = vrot.slane %v1056, 4
      %v1059 = vrot.slane %v1008, 5
      %v1060 = vsel %vm674, %v1058, %v1059
      %v1061 = vrot.slane %v1059, 4
      %v1062 = vrot.slane %v1009, 5
      %v1063 = vsel %vm674, %v1061, %v1062
      %v1064 = vrot.slane %v1062, 4
      %v1065 = vrot.slane %v1010, 5
      %v1066 = vsel %vm674, %v1064, %v1065
      %v1067 = vrot.slane %v1065, 4
      %v1068 = vrot.slane %v1011, 5
      %v1069 = vsel %vm674, %v1067, %v1068
      %v1070 = vrot.slane %v1068, 4
      %v1071 = vrot.slane %v1012, 5
      %v1072 = vsel %vm674, %v1070, %v1071
      %v1073 = vrot.slane %v1071, 4
      %v1074 = vrot.slane %v1013, 5
      %v1075 = vsel %vm674, %v1073, %v1074
      %v1076 = vrot.slane %v1074, 4
      %v1077 = vrot.slane %v1014, 5
      %v1078 = vsel %vm674, %v1076, %v1077
      %v1079 = vrot.slane %v1077, 4
      %v1080 = vrot.slane %v1015, 5
      %v1081 = vsel %vm674, %v1079, %v1080
      %1082 = vrot.lane.b32.xlu0 %v1036, 80
      %v1083 = vpop.permute.xlu0 %1082
      %1084 = vrot.lane.b32.xlu0 %v1039, 80
      %v1085 = vpop.permute.xlu0 %1084
      %1086 = vrot.lane.b32.xlu0 %v1042, 80
      %v1087 = vpop.permute.xlu0 %1086
      %1088 = vrot.lane.b32.xlu0 %v1045, 80
      %v1089 = vpop.permute.xlu0 %1088
      %1090 = vrot.lane.b32.xlu0 %v1048, 80
      %v1091 = vpop.permute.xlu0 %1090
      %1092 = vrot.lane.b32.xlu0 %v1051, 80
      %v1093 = vpop.permute.xlu0 %1092
      %1094 = vrot.lane.b32.xlu0 %v1054, 80
      %v1095 = vpop.permute.xlu0 %1094
      %1096 = vrot.lane.b32.xlu0 %v1057, 80
      %v1097 = vpop.permute.xlu0 %1096
      %1098 = vrot.lane.b32.xlu0 %v1060, 80
      %v1099 = vpop.permute.xlu0 %1098
      %1100 = vrot.lane.b32.xlu0 %v1063, 80
      %v1101 = vpop.permute.xlu0 %1100
      %1102 = vrot.lane.b32.xlu0 %v1066, 80
      %v1103 = vpop.permute.xlu0 %1102
      %1104 = vrot.lane.b32.xlu0 %v1069, 80
      %v1105 = vpop.permute.xlu0 %1104
      %1106 = vrot.lane.b32.xlu0 %v1072, 80
      %v1107 = vpop.permute.xlu0 %1106
      %1108 = vrot.lane.b32.xlu0 %v1075, 80
      %v1109 = vpop.permute.xlu0 %1108
      %1110 = vrot.lane.b32.xlu0 %v1078, 80
      %v1111 = vpop.permute.xlu0 %1110
      %1112 = vrot.lane.b32.xlu0 %v1081, 80
      %v1113 = vpop.permute.xlu0 %1112
      %vm1130 = vcmask 781952
      %1131 = vst.msk [vmem:[#allocation4] sm:$0xf] %vm1130, %v1083
      %1132 = vst.msk [vmem:[#allocation4 + $0x8] sm:$0xf] %vm1130, %v1085
      %1133 = vst.msk [vmem:[#allocation4 + $0x10] sm:$0xf] %vm1130, %v1087
      %1134 = vst.msk [vmem:[#allocation4 + $0x18] sm:$0xf] %vm1130, %v1089
      %1135 = vst.msk [vmem:[#allocation4 + $0x20] sm:$0xf] %vm1130, %v1091
      %1136 = vst.msk [vmem:[#allocation4 + $0x28] sm:$0xf] %vm1130, %v1093
      %1137 = vst.msk [vmem:[#allocation4 + $0x30] sm:$0xf] %vm1130, %v1095
      %1138 = vst.msk [vmem:[#allocation4 + $0x38] sm:$0xf] %vm1130, %v1097
      %1139 = vst.msk [vmem:[#allocation4 + $0x40] sm:$0xf] %vm1130, %v1099
      %1140 = vst.msk [vmem:[#allocation4 + $0x48] sm:$0xf] %vm1130, %v1101
      %1141 = vst.msk [vmem:[#allocation4 + $0x50] sm:$0xf] %vm1130, %v1103
      %1142 = vst.msk [vmem:[#allocation4 + $0x58] sm:$0xf] %vm1130, %v1105
      %1143 = vst.msk [vmem:[#allocation4 + $0x60] sm:$0xf] %vm1130, %v1107
      %1144 = vst.msk [vmem:[#allocation4 + $0x68] sm:$0xf] %vm1130, %v1109
      %1145 = vst.msk [vmem:[#allocation4 + $0x70] sm:$0xf] %vm1130, %v1111
      %1146 = vst.msk [vmem:[#allocation4 + $0x78] sm:$0xf] %vm1130, %v1113
      %v1147 = vld [vmem:[#allocation2 + $0x10] sm:$0xf]
      %v1148 = vld [vmem:[#allocation2 + $0x14] sm:$0xf]
      %v1149 = vld [vmem:[#allocation2 + $0x18] sm:$0xf]
      %v1150 = vld [vmem:[#allocation2 + $0x1c] sm:$0xf]
      %v1151 = vld [vmem:[#allocation2 + $0x20] sm:$0xf]
      %v1152 = vld [vmem:[#allocation2 + $0x24] sm:$0xf]
      %v1153 = vld [vmem:[#allocation2 + $0x28] sm:$0xf]
      %v1154 = vld [vmem:[#allocation2 + $0x2c] sm:$0xf]
      %v1155 = vld [vmem:[#allocation2 + $0x30] sm:$0xf]
      %v1156 = vld [vmem:[#allocation2 + $0x34] sm:$0xf]
      %v1157 = vld [vmem:[#allocation2 + $0x38] sm:$0xf]
      %v1158 = vld [vmem:[#allocation2 + $0x3c] sm:$0xf]
      %v1159 = vld [vmem:[#allocation2 + $0x40] sm:$0xf]
      %v1160 = vld [vmem:[#allocation2 + $0x44] sm:$0xf]
      %v1161 = vld [vmem:[#allocation2 + $0x48] sm:$0xf]
      %v1162 = vld [vmem:[#allocation2 + $0x4c] sm:$0xf]
      %1179 = vrot.lane.b32.xlu0 %v1147, 96
      %v1180 = vpop.permute.xlu0 %1179
      %1181 = vrot.lane.b32.xlu0 %v1148, 96
      %v1182 = vpop.permute.xlu0 %1181
      %1183 = vrot.lane.b32.xlu0 %v1149, 96
      %v1184 = vpop.permute.xlu0 %1183
      %1185 = vrot.lane.b32.xlu0 %v1150, 96
      %v1186 = vpop.permute.xlu0 %1185
      %1187 = vrot.lane.b32.xlu0 %v1151, 96
      %v1188 = vpop.permute.xlu0 %1187
      %1189 = vrot.lane.b32.xlu0 %v1152, 96
      %v1190 = vpop.permute.xlu0 %1189
      %1191 = vrot.lane.b32.xlu0 %v1153, 96
      %v1192 = vpop.permute.xlu0 %1191
      %1193 = vrot.lane.b32.xlu0 %v1154, 96
      %v1194 = vpop.permute.xlu0 %1193
      %1195 = vrot.lane.b32.xlu0 %v1155, 96
      %v1196 = vpop.permute.xlu0 %1195
      %1197 = vrot.lane.b32.xlu0 %v1156, 96
      %v1198 = vpop.permute.xlu0 %1197
      %1199 = vrot.lane.b32.xlu0 %v1157, 96
      %v1200 = vpop.permute.xlu0 %1199
      %1201 = vrot.lane.b32.xlu0 %v1158, 96
      %v1202 = vpop.permute.xlu0 %1201
      %1203 = vrot.lane.b32.xlu0 %v1159, 96
      %v1204 = vpop.permute.xlu0 %1203
      %1205 = vrot.lane.b32.xlu0 %v1160, 96
      %v1206 = vpop.permute.xlu0 %1205
      %1207 = vrot.lane.b32.xlu0 %v1161, 96
      %v1208 = vpop.permute.xlu0 %1207
      %1209 = vrot.lane.b32.xlu0 %v1162, 96
      %v1210 = vpop.permute.xlu0 %1209
      %vm1227 = vcmask 913152
      %1228 = vst.msk [vmem:[#allocation4] sm:$0xf] %vm1227, %v1180
      %1229 = vst.msk [vmem:[#allocation4 + $0x8] sm:$0xf] %vm1227, %v1182
      %1230 = vst.msk [vmem:[#allocation4 + $0x10] sm:$0xf] %vm1227, %v1184
      %1231 = vst.msk [vmem:[#allocation4 + $0x18] sm:$0xf] %vm1227, %v1186
      %1232 = vst.msk [vmem:[#allocation4 + $0x20] sm:$0xf] %vm1227, %v1188
      %1233 = vst.msk [vmem:[#allocation4 + $0x28] sm:$0xf] %vm1227, %v1190
      %1234 = vst.msk [vmem:[#allocation4 + $0x30] sm:$0xf] %vm1227, %v1192
      %1235 = vst.msk [vmem:[#allocation4 + $0x38] sm:$0xf] %vm1227, %v1194
      %1236 = vst.msk [vmem:[#allocation4 + $0x40] sm:$0xf] %vm1227, %v1196
      %1237 = vst.msk [vmem:[#allocation4 + $0x48] sm:$0xf] %vm1227, %v1198
      %1238 = vst.msk [vmem:[#allocation4 + $0x50] sm:$0xf] %vm1227, %v1200
      %1239 = vst.msk [vmem:[#allocation4 + $0x58] sm:$0xf] %vm1227, %v1202
      %1240 = vst.msk [vmem:[#allocation4 + $0x60] sm:$0xf] %vm1227, %v1204
      %1241 = vst.msk [vmem:[#allocation4 + $0x68] sm:$0xf] %vm1227, %v1206
      %1242 = vst.msk [vmem:[#allocation4 + $0x70] sm:$0xf] %vm1227, %v1208
      %1243 = vst.msk [vmem:[#allocation4 + $0x78] sm:$0xf] %vm1227, %v1210
      %v1244 = vld [vmem:[#allocation3 + $0x21] sm:$0xff]
      %v1245 = vld [vmem:[#allocation3 + $0x29] sm:$0xff]
      %v1246 = vld [vmem:[#allocation3 + $0x31] sm:$0xff]
      %v1247 = vld [vmem:[#allocation3 + $0x39] sm:$0xff]
      %v1248 = vld [vmem:[#allocation3 + $0x41] sm:$0xff]
      %v1249 = vld [vmem:[#allocation3 + $0x49] sm:$0xff]
      %v1250 = vld [vmem:[#allocation3 + $0x51] sm:$0xff]
      %v1251 = vld [vmem:[#allocation3 + $0x59] sm:$0xff]
      %v1252 = vld [vmem:[#allocation3 + $0x61] sm:$0xff]
      %v1253 = vld [vmem:[#allocation3 + $0x69] sm:$0xff]
      %v1254 = vld [vmem:[#allocation3 + $0x71] sm:$0xff]
      %v1255 = vld [vmem:[#allocation3 + $0x79] sm:$0xff]
      %v1256 = vld [vmem:[#allocation3 + $0x81] sm:$0xff]
      %v1257 = vld [vmem:[#allocation3 + $0x89] sm:$0xff]
      %v1258 = vld [vmem:[#allocation3 + $0x91] sm:$0xff]
      %v1259 = vld [vmem:[#allocation3 + $0x99] sm:$0xff]
      %v1260 = vpack.c.bf16 %v1244, %v1244
      %v1261 = vpack.c.bf16 %v1245, %v1245
      %v1262 = vpack.c.bf16 %v1246, %v1246
      %v1263 = vpack.c.bf16 %v1247, %v1247
      %v1264 = vpack.c.bf16 %v1248, %v1248
      %v1265 = vpack.c.bf16 %v1249, %v1249
      %v1266 = vpack.c.bf16 %v1250, %v1250
      %v1267 = vpack.c.bf16 %v1251, %v1251
      %v1268 = vpack.c.bf16 %v1252, %v1252
      %v1269 = vpack.c.bf16 %v1253, %v1253
      %v1270 = vpack.c.bf16 %v1254, %v1254
      %v1271 = vpack.c.bf16 %v1255, %v1255
      %v1272 = vpack.c.bf16 %v1256, %v1256
      %v1273 = vpack.c.bf16 %v1257, %v1257
      %v1274 = vpack.c.bf16 %v1258, %v1258
      %v1275 = vpack.c.bf16 %v1259, %v1259
      %1292 = vrot.lane.b32.xlu0 %v1260, 112
      %v1293 = vpop.permute.xlu0 %1292
      %1294 = vrot.lane.b32.xlu0 %v1261, 112
      %v1295 = vpop.permute.xlu0 %1294
      %1296 = vrot.lane.b32.xlu0 %v1262, 112
      %v1297 = vpop.permute.xlu0 %1296
      %1298 = vrot.lane.b32.xlu0 %v1263, 112
      %v1299 = vpop.permute.xlu0 %1298
      %1300 = vrot.lane.b32.xlu0 %v1264, 112
      %v1301 = vpop.permute.xlu0 %1300
      %1302 = vrot.lane.b32.xlu0 %v1265, 112
      %v1303 = vpop.permute.xlu0 %1302
      %1304 = vrot.lane.b32.xlu0 %v1266, 112
      %v1305 = vpop.permute.xlu0 %1304
      %1306 = vrot.lane.b32.xlu0 %v1267, 112
      %v1307 = vpop.permute.xlu0 %1306
      %1308 = vrot.lane.b32.xlu0 %v1268, 112
      %v1309 = vpop.permute.xlu0 %1308
      %1310 = vrot.lane.b32.xlu0 %v1269, 112
      %v1311 = vpop.permute.xlu0 %1310
      %1312 = vrot.lane.b32.xlu0 %v1270, 112
      %v1313 = vpop.permute.xlu0 %1312
      %1314 = vrot.lane.b32.xlu0 %v1271, 112
      %v1315 = vpop.permute.xlu0 %1314
      %1316 = vrot.lane.b32.xlu0 %v1272, 112
      %v1317 = vpop.permute.xlu0 %1316
      %1318 = vrot.lane.b32.xlu0 %v1273, 112
      %v1319 = vpop.permute.xlu0 %1318
      %1320 = vrot.lane.b32.xlu0 %v1274, 112
      %v1321 = vpop.permute.xlu0 %1320
      %1322 = vrot.lane.b32.xlu0 %v1275, 112
      %v1323 = vpop.permute.xlu0 %1322
      %vm1340 = vcmask 1044352
      %1341 = vst.msk [vmem:[#allocation4] sm:$0xf] %vm1340, %v1293
      %1342 = vst.msk [vmem:[#allocation4 + $0x8] sm:$0xf] %vm1340, %v1295
      %1343 = vst.msk [vmem:[#allocation4 + $0x10] sm:$0xf] %vm1340, %v1297
      %1344 = vst.msk [vmem:[#allocation4 + $0x18] sm:$0xf] %vm1340, %v1299
      %1345 = vst.msk [vmem:[#allocation4 + $0x20] sm:$0xf] %vm1340, %v1301
      %1346 = vst.msk [vmem:[#allocation4 + $0x28] sm:$0xf] %vm1340, %v1303
      %1347 = vst.msk [vmem:[#allocation4 + $0x30] sm:$0xf] %vm1340, %v1305
      %1348 = vst.msk [vmem:[#allocation4 + $0x38] sm:$0xf] %vm1340, %v1307
      %1349 = vst.msk [vmem:[#allocation4 + $0x40] sm:$0xf] %vm1340, %v1309
      %1350 = vst.msk [vmem:[#allocation4 + $0x48] sm:$0xf] %vm1340, %v1311
      %1351 = vst.msk [vmem:[#allocation4 + $0x50] sm:$0xf] %vm1340, %v1313
      %1352 = vst.msk [vmem:[#allocation4 + $0x58] sm:$0xf] %vm1340, %v1315
      %1353 = vst.msk [vmem:[#allocation4 + $0x60] sm:$0xf] %vm1340, %v1317
      %1354 = vst.msk [vmem:[#allocation4 + $0x68] sm:$0xf] %vm1340, %v1319
      %1355 = vst.msk [vmem:[#allocation4 + $0x70] sm:$0xf] %vm1340, %v1321
      %1356 = vst.msk [vmem:[#allocation4 + $0x78] sm:$0xf] %vm1340, %v1323
      %v1357 = vld [vmem:[#allocation2 + $0x10] sm:$0xe]
      %v1358 = vld [vmem:[#allocation2 + $0x14] sm:$0xf]
      %v1359 = vld [vmem:[#allocation2 + $0x18] sm:$0xf]
      %v1360 = vld [vmem:[#allocation2 + $0x1c] sm:$0xf]
      %v1361 = vld [vmem:[#allocation2 + $0x20] sm:$0xf]
      %v1362 = vld [vmem:[#allocation2 + $0x24] sm:$0xf]
      %v1363 = vld [vmem:[#allocation2 + $0x28] sm:$0xf]
      %v1364 = vld [vmem:[#allocation2 + $0x2c] sm:$0xf]
      %v1365 = vld [vmem:[#allocation2 + $0x30] sm:$0xf]
      %v1366 = vld [vmem:[#allocation2 + $0x34] sm:$0xf]
      %v1367 = vld [vmem:[#allocation2 + $0x38] sm:$0xf]
      %v1368 = vld [vmem:[#allocation2 + $0x3c] sm:$0xf]
      %v1369 = vld [vmem:[#allocation2 + $0x40] sm:$0xf]
      %v1370 = vld [vmem:[#allocation2 + $0x44] sm:$0xf]
      %v1371 = vld [vmem:[#allocation2 + $0x48] sm:$0xf]
      %v1372 = vld [vmem:[#allocation2 + $0x4c] sm:$0xf]
      %v1373 = vld [vmem:[#allocation2 + $0x50] sm:$0x1]
      %v1391 = vrot.slane %v1357, 5
      %v1392 = vrot.slane %v1391, 4
      %v1393 = vrot.slane %v1358, 5
      %v1394 = vsel %vm674, %v1392, %v1393
      %v1395 = vrot.slane %v1393, 4
      %v1396 = vrot.slane %v1359, 5
      %v1397 = vsel %vm674, %v1395, %v1396
      %v1398 = vrot.slane %v1396, 4
      %v1399 = vrot.slane %v1360, 5
      %v1400 = vsel %vm674, %v1398, %v1399
      %v1401 = vrot.slane %v1399, 4
      %v1402 = vrot.slane %v1361, 5
      %v1403 = vsel %vm674, %v1401, %v1402
      %v1404 = vrot.slane %v1402, 4
      %v1405 = vrot.slane %v1362, 5
      %v1406 = vsel %vm674, %v1404, %v1405
      %v1407 = vrot.slane %v1405, 4
      %v1408 = vrot.slane %v1363, 5
      %v1409 = vsel %vm674, %v1407, %v1408
      %v1410 = vrot.slane %v1408, 4
      %v1411 = vrot.slane %v1364, 5
      %v1412 = vsel %vm674, %v1410, %v1411
      %v1413 = vrot.slane %v1411, 4
      %v1414 = vrot.slane %v1365, 5
      %v1415 = vsel %vm674, %v1413, %v1414
      %v1416 = vrot.slane %v1414, 4
      %v1417 = vrot.slane %v1366, 5
      %v1418 = vsel %vm674, %v1416, %v1417
      %v1419 = vrot.slane %v1417, 4
      %v1420 = vrot.slane %v1367, 5
      %v1421 = vsel %vm674, %v1419, %v1420
      %v1422 = vrot.slane %v1420, 4
      %v1423 = vrot.slane %v1368, 5
      %v1424 = vsel %vm674, %v1422, %v1423
      %v1425 = vrot.slane %v1423, 4
      %v1426 = vrot.slane %v1369, 5
      %v1427 = vsel %vm674, %v1425, %v1426
      %v1428 = vrot.slane %v1426, 4
      %v1429 = vrot.slane %v1370, 5
      %v1430 = vsel %vm674, %v1428, %v1429
      %v1431 = vrot.slane %v1429, 4
      %v1432 = vrot.slane %v1371, 5
      %v1433 = vsel %vm674, %v1431, %v1432
      %v1434 = vrot.slane %v1432, 4
      %v1435 = vrot.slane %v1372, 5
      %v1436 = vsel %vm674, %v1434, %v1435
      %v1437 = vrot.slane %v1435, 4
      %v1438 = vrot.slane %v1373, 5
      %v1439 = vsel %vm674, %v1437, %v1438
      %1456 = vst.msk [vmem:[#allocation4 + $0x4] sm:$0xf] %vm419, %v1394
      %1457 = vst.msk [vmem:[#allocation4 + $0xc] sm:$0xf] %vm419, %v1397
      %1458 = vst.msk [vmem:[#allocation4 + $0x14] sm:$0xf] %vm419, %v1400
      %1459 = vst.msk [vmem:[#allocation4 + $0x1c] sm:$0xf] %vm419, %v1403
      %1460 = vst.msk [vmem:[#allocation4 + $0x24] sm:$0xf] %vm419, %v1406
      %1461 = vst.msk [vmem:[#allocation4 + $0x2c] sm:$0xf] %vm419, %v1409
      %1462 = vst.msk [vmem:[#allocation4 + $0x34] sm:$0xf] %vm419, %v1412
      %1463 = vst.msk [vmem:[#allocation4 + $0x3c] sm:$0xf] %vm419, %v1415
      %1464 = vst.msk [vmem:[#allocation4 + $0x44] sm:$0xf] %vm419, %v1418
      %1465 = vst.msk [vmem:[#allocation4 + $0x4c] sm:$0xf] %vm419, %v1421
      %1466 = vst.msk [vmem:[#allocation4 + $0x54] sm:$0xf] %vm419, %v1424
      %1467 = vst.msk [vmem:[#allocation4 + $0x5c] sm:$0xf] %vm419, %v1427
      %1468 = vst.msk [vmem:[#allocation4 + $0x64] sm:$0xf] %vm419, %v1430
      %1469 = vst.msk [vmem:[#allocation4 + $0x6c] sm:$0xf] %vm419, %v1433
      %1470 = vst.msk [vmem:[#allocation4 + $0x74] sm:$0xf] %vm419, %v1436
      %1471 = vst.msk [vmem:[#allocation4 + $0x7c] sm:$0xf] %vm419, %v1439
      %v1472 = vld [vmem:[#allocation4] sm:$0xff]
      %v1473 = vld [vmem:[#allocation4 + $0x8] sm:$0xff]
      %v1474 = vld [vmem:[#allocation4 + $0x10] sm:$0xff]
      %v1475 = vld [vmem:[#allocation4 + $0x18] sm:$0xff]
      %v1476 = vld [vmem:[#allocation4 + $0x20] sm:$0xff]
      %v1477 = vld [vmem:[#allocation4 + $0x28] sm:$0xff]
      %v1478 = vld [vmem:[#allocation4 + $0x30] sm:$0xff]
      %v1479 = vld [vmem:[#allocation4 + $0x38] sm:$0xff]
      %v1480 = vld [vmem:[#allocation4 + $0x40] sm:$0xff]
      %v1481 = vld [vmem:[#allocation4 + $0x48] sm:$0xff]
      %v1482 = vld [vmem:[#allocation4 + $0x50] sm:$0xff]
      %v1483 = vld [vmem:[#allocation4 + $0x58] sm:$0xff]
      %v1484 = vld [vmem:[#allocation4 + $0x60] sm:$0xff]
      %v1485 = vld [vmem:[#allocation4 + $0x68] sm:$0xff]
      %v1486 = vld [vmem:[#allocation4 + $0x70] sm:$0xff]
      %v1487 = vld [vmem:[#allocation4 + $0x78] sm:$0xff]
      %v1488 = vld [vmem:[%s2] sm:$0xf]
      %v1489 = vld [vmem:[%s2 + $0x4] sm:$0xf]
      %v1490 = vld [vmem:[%s2 + $0x8] sm:$0xf]
      %v1491 = vld [vmem:[%s2 + $0xc] sm:$0xf]
      %v1492 = vld [vmem:[%s2 + $0x10] sm:$0xf]
      %v1493 = vld [vmem:[%s2 + $0x14] sm:$0xf]
      %v1494 = vld [vmem:[%s2 + $0x18] sm:$0xf]
      %v1495 = vld [vmem:[%s2 + $0x1c] sm:$0xf]
      %v1496 = vld [vmem:[%s2 + $0x20] sm:$0xf]
      %v1497 = vld [vmem:[%s2 + $0x24] sm:$0xf]
      %v1498 = vld [vmem:[%s2 + $0x28] sm:$0xf]
      %v1499 = vld [vmem:[%s2 + $0x2c] sm:$0xf]
      %v1500 = vld [vmem:[%s2 + $0x30] sm:$0xf]
      %v1501 = vld [vmem:[%s2 + $0x34] sm:$0xf]
      %v1502 = vld [vmem:[%s2 + $0x38] sm:$0xf]
      %v1503 = vld [vmem:[%s2 + $0x3c] sm:$0xf]
      %v1504 = vld [vmem:[%s2 + $0x40] sm:$0xf]
      %v1505 = vld [vmem:[%s2 + $0x44] sm:$0xf]
      %v1506 = vld [vmem:[%s3] sm:$0x1]
      %v1508 = vperm.slane %v1506, 0
      %v1526 = vunpack.c.l.b16 %v1472
      %v1527 = vunpack.c.h.b16 %v1472
      %v1528 = vunpack.c.l.b16 %v1473
      %v1529 = vunpack.c.h.b16 %v1473
      %v1530 = vunpack.c.l.b16 %v1474
      %v1531 = vunpack.c.h.b16 %v1474
      %v1532 = vunpack.c.l.b16 %v1475
      %v1533 = vunpack.c.h.b16 %v1475
      %v1534 = vunpack.c.l.b16 %v1476
      %v1535 = vunpack.c.h.b16 %v1476
      %v1536 = vunpack.c.l.b16 %v1477
      %v1537 = vunpack.c.h.b16 %v1477
      %v1538 = vunpack.c.l.b16 %v1478
      %v1539 = vunpack.c.h.b16 %v1478
      %v1540 = vunpack.c.l.b16 %v1479
      %v1541 = vunpack.c.h.b16 %v1479
      %v1542 = vunpack.c.l.b16 %v1480
      %v1543 = vunpack.c.h.b16 %v1480
      %v1544 = vunpack.c.l.b16 %v1481
      %v1545 = vunpack.c.h.b16 %v1481
      %v1546 = vunpack.c.l.b16 %v1482
      %v1547 = vunpack.c.h.b16 %v1482
      %v1548 = vunpack.c.l.b16 %v1483
      %v1549 = vunpack.c.h.b16 %v1483
      %v1550 = vunpack.c.l.b16 %v1484
      %v1551 = vunpack.c.h.b16 %v1484
      %v1552 = vunpack.c.l.b16 %v1485
      %v1553 = vunpack.c.h.b16 %v1485
      %v1554 = vunpack.c.l.b16 %v1486
      %v1555 = vunpack.c.h.b16 %v1486
      %v1556 = vunpack.c.l.b16 %v1487
      %v1557 = vunpack.c.h.b16 %v1487
      %v1558 = vpack.c.b16 %v1528, %v1526
      %v1559 = vpack.c.b16 %v1529, %v1527
      %v1560 = vpack.c.b16 %v1532, %v1530
      %v1561 = vpack.c.b16 %v1533, %v1531
      %v1562 = vpack.c.b16 %v1536, %v1534
      %v1563 = vpack.c.b16 %v1537, %v1535
      %v1564 = vpack.c.b16 %v1540, %v1538
      %v1565 = vpack.c.b16 %v1541, %v1539
      %v1566 = vpack.c.b16 %v1544, %v1542
      %v1567 = vpack.c.b16 %v1545, %v1543
      %v1568 = vpack.c.b16 %v1548, %v1546
      %v1569 = vpack.c.b16 %v1549, %v1547
      %v1570 = vpack.c.b16 %v1552, %v1550
      %v1571 = vpack.c.b16 %v1553, %v1551
      %v1572 = vpack.c.b16 %v1556, %v1554
      %v1573 = vpack.c.b16 %v1557, %v1555
      %v1600 = vunpack.c.l.b16 %v1488
      %v1601 = vunpack.c.l.b16 %v1489
      %v1602 = vunpack.c.l.b16 %v1490
      %v1603 = vunpack.c.l.b16 %v1491
      %v1604 = vunpack.c.l.b16 %v1492
      %v1605 = vunpack.c.l.b16 %v1493
      %v1606 = vunpack.c.l.b16 %v1494
      %v1607 = vunpack.c.l.b16 %v1495
      %v1608 = vunpack.c.l.b16 %v1496
      %v1609 = vunpack.c.l.b16 %v1497
      %v1610 = vunpack.c.l.b16 %v1498
      %v1611 = vunpack.c.l.b16 %v1499
      %v1612 = vunpack.c.l.b16 %v1500
      %v1613 = vunpack.c.l.b16 %v1501
      %v1614 = vunpack.c.l.b16 %v1502
      %v1615 = vunpack.c.l.b16 %v1503
      %v1616 = vunpack.c.l.b16 %v1504
      %v1617 = vunpack.c.l.b16 %v1505
      %v1618 = vpack.c.b16 %v1601, %v1600
      %v1619 = vpack.c.b16 %v1603, %v1602
      %v1620 = vpack.c.b16 %v1605, %v1604
      %v1621 = vpack.c.b16 %v1607, %v1606
      %v1622 = vpack.c.b16 %v1609, %v1608
      %v1623 = vpack.c.b16 %v1611, %v1610
      %v1624 = vpack.c.b16 %v1613, %v1612
      %v1625 = vpack.c.b16 %v1615, %v1614
      %v1626 = vpack.c.b16 %v1617, %v1616
      %v1637 = vsel %vm460, %v1559, 0
      %v1640 = vsel %vm460, %v1561, 0
      %v1643 = vsel %vm460, %v1563, 0
      %v1646 = vsel %vm460, %v1565, 0
      %v1649 = vsel %vm460, %v1567, 0
      %v1652 = vsel %vm460, %v1569, 0
      %v1655 = vsel %vm460, %v1571, 0
      %v1658 = vsel %vm460, %v1573, 0
      %1660 = vmatpush.bf16.msra.mxu0 %v1625
      %1661 = vmatpush.bf16.msra.mxu0 %v1624
      %1662 = vmatpush.bf16.msra.mxu0 %v1623
      %1663 = vmatpush.bf16.msra.mxu0 %v1622
      %1664 = vmatpush.bf16.msra.mxu0 %v1621
      %1665 = vmatpush.bf16.msra.mxu0 %v1620
      %1666 = vmatpush.bf16.msra.mxu0 %v1619
      %1667 = vmatpush.bf16.msra.mxu0 %v1618
      %1668 = vmatmul.bf16.gmra.mxu0 %v1558
      %v1669 = vpop.f32.mrf.mxu0
      %v1670 = vadd.f32 %v1508, %v1669
      %v1671 = vpop.f32.mrf.mxu0
      %1672 = vmatmul.bf16.gmra.mxu0 %v1560
      %v1673 = vpop.f32.mrf.mxu0
      %v1674 = vadd.f32 %v1508, %v1673
      %v1675 = vpop.f32.mrf.mxu0
      %1676 = vmatmul.bf16.gmra.mxu0 %v1562
      %v1677 = vpop.f32.mrf.mxu0
      %v1678 = vadd.f32 %v1508, %v1677
      %v1679 = vpop.f32.mrf.mxu0
      %1680 = vmatmul.bf16.gmra.mxu0 %v1564
      %v1681 = vpop.f32.mrf.mxu0
      %v1682 = vadd.f32 %v1508, %v1681
      %v1683 = vpop.f32.mrf.mxu0
      %1684 = vmatmul.bf16.gmra.mxu0 %v1566
      %v1685 = vpop.f32.mrf.mxu0
      %v1686 = vadd.f32 %v1508, %v1685
      %v1687 = vpop.f32.mrf.mxu0
      %1688 = vmatmul.bf16.gmra.mxu0 %v1568
      %v1689 = vpop.f32.mrf.mxu0
      %v1690 = vadd.f32 %v1508, %v1689
      %v1691 = vpop.f32.mrf.mxu0
      %1692 = vmatmul.bf16.gmra.mxu0 %v1570
      %v1693 = vpop.f32.mrf.mxu0
      %v1694 = vadd.f32 %v1508, %v1693
      %v1695 = vpop.f32.mrf.mxu0
      %1696 = vmatmul.bf16.gmra.mxu0 %v1572
      %v1697 = vpop.f32.mrf.mxu0
      %v1698 = vadd.f32 %v1508, %v1697
      %v1699 = vpop.f32.mrf.mxu0
      %1700 = vdwg.mxu0
      %1701 = vmatpush.bf16.msra.mxu0 0
      %1702 = vmatpush.bf16.msra.mxu0 0
      %1703 = vmatpush.bf16.msra.mxu0 0
      %1704 = vmatpush.bf16.msra.mxu0 0
      %1705 = vmatpush.bf16.msra.mxu0 0
      %1706 = vmatpush.bf16.msra.mxu0 0
      %1707 = vmatpush.bf16.msra.mxu0 0
      %1708 = vmatpush.bf16.msra.mxu0 %v1626
      %1709 = vmatmul.bf16.gmra.mxu0 %v1637
      %v1710 = vpop.f32.mrf.mxu0
      %v1711 = vadd.f32 %v1670, %v1710
      %v1712 = vpop.f32.mrf.mxu0
      %1713 = vmatmul.bf16.gmra.mxu0 %v1640
      %v1714 = vpop.f32.mrf.mxu0
      %v1715 = vadd.f32 %v1674, %v1714
      %v1716 = vpop.f32.mrf.mxu0
      %1717 = vmatmul.bf16.gmra.mxu0 %v1643
      %v1718 = vpop.f32.mrf.mxu0
      %v1719 = vadd.f32 %v1678, %v1718
      %v1720 = vpop.f32.mrf.mxu0
      %1721 = vmatmul.bf16.gmra.mxu0 %v1646
      %v1722 = vpop.f32.mrf.mxu0
      %v1723 = vadd.f32 %v1682, %v1722
      %v1724 = vpop.f32.mrf.mxu0
      %1725 = vmatmul.bf16.gmra.mxu0 %v1649
      %v1726 = vpop.f32.mrf.mxu0
      %v1727 = vadd.f32 %v1686, %v1726
      %v1728 = vpop.f32.mrf.mxu0
      %1729 = vmatmul.bf16.gmra.mxu0 %v1652
      %v1730 = vpop.f32.mrf.mxu0
      %v1731 = vadd.f32 %v1690, %v1730
      %v1732 = vpop.f32.mrf.mxu0
      %1733 = vmatmul.bf16.gmra.mxu0 %v1655
      %v1734 = vpop.f32.mrf.mxu0
      %v1735 = vadd.f32 %v1694, %v1734
      %v1736 = vpop.f32.mrf.mxu0
      %1737 = vmatmul.bf16.gmra.mxu0 %v1658
      %v1738 = vpop.f32.mrf.mxu0
      %v1739 = vadd.f32 %v1698, %v1738
      %v1740 = vpop.f32.mrf.mxu0
      %1741 = vdwg.mxu0
      %vm1742 = vcmask 64512
      %1743 = vst.msk [vmem:[%s380] sm:$0xff] %vm1742, %v1711
      %1744 = vst.msk [vmem:[%s380 + $0x8] sm:$0xff] %vm1742, %v1715
      %1745 = vst.msk [vmem:[%s380 + $0x10] sm:$0xff] %vm1742, %v1719
      %1746 = vst.msk [vmem:[%s380 + $0x18] sm:$0xff] %vm1742, %v1723
      %1747 = vst.msk [vmem:[%s380 + $0x20] sm:$0xff] %vm1742, %v1727
      %1748 = vst.msk [vmem:[%s380 + $0x28] sm:$0xff] %vm1742, %v1731
      %1749 = vst.msk [vmem:[%s380 + $0x30] sm:$0xff] %vm1742, %v1735
      %1750 = vst.msk [vmem:[%s380 + $0x38] sm:$0xff] %vm1742, %v1739
      %s1751 = smul.u32 %s23, 8
      %v1752 = vstv %s1751
      %v1753 = vadd.s32 %v1752, 1
      %v1754 = vadd.s32 %v1752, 2
      %v1755 = vadd.s32 %v1752, 3
      %v1756 = vadd.s32 %v1752, 4
      %v1757 = vadd.s32 %v1752, 5
      %v1758 = vadd.s32 %v1752, 6
      %v1759 = vadd.s32 %v1752, 7
      %vm1760 = vcmp.lt.s32.totalorder %v1752, 8
      %vm1761 = vcmp.lt.s32.totalorder %v1753, 8
      %vm1762 = vcmp.lt.s32.totalorder %v1754, 8
      %vm1763 = vcmp.lt.s32.totalorder %v1755, 8
      %vm1764 = vcmp.lt.s32.totalorder %v1756, 8
      %vm1765 = vcmp.lt.s32.totalorder %v1757, 8
      %vm1766 = vcmp.lt.s32.totalorder %v1758, 8
      %vm1767 = vcmp.lt.s32.totalorder %v1759, 8
      %v1768 = vsel %vm1760, 1, 0
      %v1769 = vsel %vm1761, 1, 0
      %v1770 = vsel %vm1762, 1, 0
      %v1771 = vsel %vm1763, 1, 0
      %v1772 = vsel %vm1764, 1, 0
      %v1773 = vsel %vm1765, 1, 0
      %v1774 = vsel %vm1766, 1, 0
      %v1775 = vsel %vm1767, 1, 0
      %v1776 = vcvt.s32.f32 %v1768
      %v1777 = vcvt.s32.f32 %v1769
      %v1778 = vcvt.s32.f32 %v1770
      %v1779 = vcvt.s32.f32 %v1771
      %v1780 = vcvt.s32.f32 %v1772
      %v1781 = vcvt.s32.f32 %v1773
      %v1782 = vcvt.s32.f32 %v1774
      %v1783 = vcvt.s32.f32 %v1775
      %v1784 = vmul.f32 %v1711, %v1776
      %v1785 = vmul.f32 %v1715, %v1777
      %v1786 = vmul.f32 %v1719, %v1778
      %v1787 = vmul.f32 %v1723, %v1779
      %v1788 = vmul.f32 %v1727, %v1780
      %v1789 = vmul.f32 %v1731, %v1781
      %v1790 = vmul.f32 %v1735, %v1782
      %v1791 = vmul.f32 %v1739, %v1783
      %v1792 = vadd.f32 %v1784, %v1785
      %v1793 = vadd.f32 %v1792, %v1786
      %v1794 = vadd.f32 %v1793, %v1787
      %v1795 = vadd.f32 %v1794, %v1788
      %v1796 = vadd.f32 %v1795, %v1789
      %v1797 = vadd.f32 %v1796, %v1790
      %v1798 = vadd.f32 %v1797, %v1791
      %v1799 = vrot.slane %v1798, 4
      %v1800 = vadd.f32 %v1798, %v1799
      %v1801 = vrot.slane %v1800, 2
      %v1802 = vadd.f32 %v1800, %v1801
      %v1803 = vrot.slane %v1802, 1
      %v1804 = vadd.f32 %v1802, %v1803
      %1805 = vst [vmem:[%s387] sm:$0x1] %v1804
      %v1806 = vmul.f32 %v1784, %v1711
      %v1807 = vmul.f32 %v1785, %v1715
      %v1808 = vmul.f32 %v1786, %v1719
      %v1809 = vmul.f32 %v1787, %v1723
      %v1810 = vmul.f32 %v1788, %v1727
      %v1811 = vmul.f32 %v1789, %v1731
      %v1812 = vmul.f32 %v1790, %v1735
      %v1813 = vmul.f32 %v1791, %v1739
      %v1814 = vadd.f32 %v1806, %v1807
      %v1815 = vadd.f32 %v1814, %v1808
      %v1816 = vadd.f32 %v1815, %v1809
      %v1817 = vadd.f32 %v1816, %v1810
      %v1818 = vadd.f32 %v1817, %v1811
      %v1819 = vadd.f32 %v1818, %v1812
      %v1820 = vadd.f32 %v1819, %v1813
      %v1821 = vrot.slane %v1820, 4
      %v1822 = vadd.f32 %v1820, %v1821
      %v1823 = vrot.slane %v1822, 2
      %v1824 = vadd.f32 %v1822, %v1823
      %v1825 = vrot.slane %v1824, 1
      %v1826 = vadd.f32 %v1824, %v1825
      %1827 = vst [vmem:[%s393] sm:$0x1] %v1826
      %s1828 = smul.u32 8, %s23
      %p1829 = scmp.lt.s32.totalorder %s22, 1
      %s1830 = scalar_select %p1829, %s22, 1
      %p1831 = scmp.lt.s32.totalorder %s1828, 7
      %s1832 = scalar_select %p1831, %s1828, 7
      %s1833 = smul.addr %s1830, 8
      %s1834 = sadd.s32 %s1832, %s1833
      %s1835 = smul.addr %s1834, 8
      %s1836 = scalar_lea.vmem %s4, %s1835
      %p1837 = scmp.lt.s32.totalorder %s22, 1
      %s1838 = scalar_select %p1837, %s22, 1
      %p1839 = scmp.lt.s32.totalorder %s23, 0
      %s1840 = scalar_select %p1839, %s23, 0
      %s1841 = sadd.s32 %s1840, %s1838
      %s1842 = scalar_lea.vmem %s5, %s1841
      %p1843 = scmp.lt.s32.totalorder %s22, 1
      %s1844 = scalar_select %p1843, %s22, 1
      %p1845 = scmp.lt.s32.totalorder %s23, 0
      %s1846 = scalar_select %p1845, %s23, 0
      %s1847 = sadd.s32 %s1846, %s1844
      %s1848 = scalar_lea.vmem %s6, %s1847
      // Predicated region
      $region37: #{encoder_block.2} parent=35 // pred_check
        %p1849 = pneg %p152
      $region38: #{encoder_block.2} parent=35 // pred_check_branch
        %1851 = sbr.rel (%p1849) target = $region40
      $region39: #{encoder_block.2} parent=35 // pred_region
        %s1852 = smul.u32 8, %s23
      $region40: #{encoder_block.2} parent=35 // pred_fallthru
        _
      // Predicated region
      $region41: #{encoder_block.2} parent=35 // pred_check
        %p1853 = pneg %p180
      $region42: #{encoder_block.2} parent=35 // pred_check_branch
        %1855 = sbr.rel (%p1853) target = $region44
      $region43: #{encoder_block.2} parent=35 // pred_region
        _
      $region44: #{encoder_block.2} parent=35 // pred_fallthru
        _
      // Predicated region
      $region45: #{encoder_block.2} parent=35 // pred_check
        %p1856 = pneg %p208
      $region46: #{encoder_block.2} parent=35 // pred_check_branch
        %1858 = sbr.rel (%p1856) target = $region48
      $region47: #{encoder_block.2} parent=35 // pred_region
        _
      $region48: #{encoder_block.2} parent=35 // pred_fallthru
        _
    $region36: #{encoder_block.2} parent=5 // pred_fallthru
      _
    %p1859 = scmp.le.s32.totalorder 2, %s13
    // Predicated region
    $region49: #{encoder_block.2} parent=5 // pred_check
      %p1860 = pneg %p1859
    $region50: #{encoder_block.2} parent=5 // pred_check_branch
      %1862 = sbr.rel (%p1860) target = $region52
    $region51: #{encoder_block.2} parent=5 // pred_region
      %s1863 = ssub.s32 %s13, 2
      // Predicated region
      $region53: #{encoder_block.2} parent=51 // pred_check
        %p1864 = pneg %p158
      $region54: #{encoder_block.2} parent=51 // pred_check_branch
        %1866 = sbr.rel (%p1864) target = $region56
      $region55: #{encoder_block.2} parent=51 // pred_region
        %s1867 = smul.u32 8, %s25
        %p1868 = scmp.lt.s32.totalorder %s24, 1
        %s1869 = scalar_select %p1868, %s24, 1
        %p1870 = scmp.lt.s32.totalorder %s1867, 7
        %s1871 = scalar_select %p1870, %s1867, 7
        %s1872 = smul.addr %s1869, 8
        %s1873 = sadd.s32 %s1871, %s1872
        %s1874 = smul.addr %s1873, 8
        %s1875 = scalar_lea.vmem %s4, %s1874
      $region56: #{encoder_block.2} parent=51 // pred_fallthru
        _
      // Predicated region
      $region57: #{encoder_block.2} parent=51 // pred_check
        %p1876 = pneg %p186
      $region58: #{encoder_block.2} parent=51 // pred_check_branch
        %1878 = sbr.rel (%p1876) target = $region60
      $region59: #{encoder_block.2} parent=51 // pred_region
        %p1879 = scmp.lt.s32.totalorder %s24, 1
        %s1880 = scalar_select %p1879, %s24, 1
        %p1881 = scmp.lt.s32.totalorder %s25, 0
        %s1882 = scalar_select %p1881, %s25, 0
        %s1883 = sadd.s32 %s1882, %s1880
        %s1884 = scalar_lea.vmem %s5, %s1883
      $region60: #{encoder_block.2} parent=51 // pred_fallthru
        _
      // Predicated region
      $region61: #{encoder_block.2} parent=51 // pred_check
        %p1885 = pneg %p214
      $region62: #{encoder_block.2} parent=51 // pred_check_branch
        %1887 = sbr.rel (%p1885) target = $region64
      $region63: #{encoder_block.2} parent=51 // pred_region
        %p1888 = scmp.lt.s32.totalorder %s24, 1
        %s1889 = scalar_select %p1888, %s24, 1
        %p1890 = scmp.lt.s32.totalorder %s25, 0
        %s1891 = scalar_select %p1890, %s25, 0
        %s1892 = sadd.s32 %s1891, %s1889
        %s1893 = scalar_lea.vmem %s6, %s1892
      $region64: #{encoder_block.2} parent=51 // pred_fallthru
        _
    $region52: #{encoder_block.2} parent=5 // pred_fallthru
      _
  $region6: #{encoder_block.2} parent=0 // loop_footer
    %s17 = sadd.s32 1, %s13
  $region7: #{encoder_block.2} parent=0 // loop_footer_branch
    %12 = sbr.rel target = $region3
  $region8: #{encoder_block.2} parent=0 // loop_exit
    _

</llo_original>
